<compile_context>
chip_gen: v5e
topology: v5e:2x2
jax: 0.10.0
libtpu: 0.0.40
codegen_flags: <defaults>
</compile_context>

<pallas_src>
import functools

import jax
import jax.numpy as jnp
from jax.experimental import pallas as pl
from jax.experimental.pallas import tpu as pltpu

LANE = 128
SUBLANE = 8


# --------------------------------------------------------------------------------------
# helpers
# --------------------------------------------------------------------------------------
def _round_up(x, m):
    return ((x + m - 1) // m) * m


def _pad2(x, rows, cols):
    return jnp.pad(x, ((0, rows - x.shape[0]), (0, cols - x.shape[1])))


def fold_bn(W, b, gamma, beta, mean, var, eps=1e-5):
    """Fold inference-mode BatchNorm1d into the preceding Linear.

    W is the PyTorch weight (out, in).  Returns (W_folded (in,out), b_folded (1,out)) so that
    x @ W_folded + b_folded == BN(Linear(x)).
    """
    scale = gamma / jnp.sqrt(var + eps)
    Wf = W.T * scale[None, :]
    bf = (b - mean) * scale + beta
    return Wf, bf.reshape(1, -1)


# --------------------------------------------------------------------------------------
# the one kernel: fine+bbox (fused layer 1), coarse encoder, one-hot gather, joint encoder
# --------------------------------------------------------------------------------------
def roi_encoder_kernel(
    use_context, nz_roi_p, bslc,                 # static config
    fine_ref, onehot_ref, coarse_ref,            # streamed / resident activations
    w1_ref, wf2_ref, wb2_ref, wb3_ref,           # bf16 weights (VMEM-resident)
    wc1_ref, wc2_ref, wj1_ref, wj2_ref,
    bias_ref,                                    # one f32 (1, total) bias vector
    out_ref,
):
    def bias(name):
        off, size = bslc[name]
        return bias_ref[:, off:off + size]       # static, 128-aligned slice

    def leaky(h):
        # LeakyReLU(0.2) == max(h, 0.2*h): 2 VALU ops/elem instead of cmp+mul+select
        return jnp.maximum(h, 0.2 * h)

    def fc(x_bf16, w_ref, bname):
        # bf16 MXU inputs, f32 accumulation; bias add + LeakyReLU in f32, cast back early
        h = jnp.dot(x_bf16, w_ref[...], preferred_element_type=jnp.float32) + bias(bname)
        return leaky(h).astype(jnp.bfloat16)

    # ---- fused fine|bbox layer 1: coords live in the padding lanes of fine_ref, the packed
    #      weight routes them to the bbox output columns [nz_roi_p:].  One N=256 MXU pass.
    h1 = fc(fine_ref[...], w1_ref, "b1")                      # (tile_b, NZ_ROI_P + NZ_BOX_P)
    h_fine = h1[:, :nz_roi_p]
    h_box = h1[:, nz_roi_p:]

    # ---- encoder_fine layer 2 ------------------------------------------------------------
    f_fine = fc(h_fine, wf2_ref, "bf2")                       # (tile_b, NZ_ROI_P) bf16

    if use_context:                                           # static python bool
        # ---- encoder_bbox layers 2-3 -----------------------------------------------------
        f_box = fc(fc(h_box, wb2_ref, "bb2"), wb3_ref, "bb3")  # (tile_b, NZ_BOX_P) bf16

        # ---- encoder_coarse (tiny: B_IMG_P rows), recomputed per tile --------------------
        f_cimg = fc(fc(coarse_ref[...], wc1_ref, "bc1"), wc2_ref, "bc2")

        # ---- index_select(feat_coarse, 0, rois[:,0]) as a bf16 one-hot MXU gather (exact)
        f_coarse = jnp.dot(onehot_ref[...], f_cimg,
                           preferred_element_type=jnp.float32).astype(jnp.bfloat16)
    else:
        f_box = jnp.zeros_like(h_box)
        f_coarse = jnp.zeros((h_box.shape[0], wc2_ref.shape[1]), jnp.bfloat16)

    # ---- encoder_joint: 128-lane-aligned concat -> single K-concat dot (no partial adds) --
    xj = jnp.concatenate([f_fine, f_coarse, f_box], axis=1)   # (tile_b, KJ) bf16
    hj = fc(xj, wj1_ref, "bj1")
    out = jnp.dot(hj, wj2_ref[...], preferred_element_type=jnp.float32) + bias("bj2")
    out_ref[...] = leaky(out).astype(out_ref.dtype)


# --------------------------------------------------------------------------------------
# wrapper
# --------------------------------------------------------------------------------------
def roi_encoder_forward(roi_img_feat, img_feat_coarse, rois, params,
                        use_context=True, tile_b=None, out_dtype=jnp.float32):
    n_rois, nc_fine = roi_img_feat.shape
    n_imgs, nc_coarse = img_feat_coarse.shape

    # fold BN into the Linear layers (inference semantics)
    fine_p = [fold_bn(*p) for p in params["fine"]]       # 2 layers
    coarse_p = [fold_bn(*p) for p in params["coarse"]]   # 2 layers
    bbox_p = [fold_bn(*p) for p in params["bbox"]]       # 3 layers
    joint_p = [fold_bn(*p) for p in params["joint"]]     # 2 layers

    nz_roi = fine_p[1][0].shape[1]
    nz_coarse = coarse_p[1][0].shape[1]
    nz_box = bbox_p[2][0].shape[1]
    nz_joint = joint_p[1][0].shape[1]

    # lane-dense padded sizes
    NZ_ROI_P = _round_up(nz_roi, LANE)
    NZ_COARSE_P = _round_up(nz_coarse, LANE)
    NZ_BOX_P = _round_up(nz_box, LANE)
    NZ_JOINT_P = _round_up(nz_joint, LANE)
    C_FINE_P = _round_up(nc_fine + 4, LANE)     # 4 spare lanes carry the bbox coords
    C_COARSE_P = _round_up(nc_coarse, LANE)
    B_IMG_P = _round_up(n_imgs, SUBLANE)

    # tile size: large tiles (per-step fixed cost otherwise dominates) but >= 2 grid steps so
    # both TensorCores of a v7x chip / megacore halves get work.  Multiple of 16 for bf16 rows.
    if tile_b is None:
        tile_b = min(512, _round_up(max(1, (n_rois + 1) // 2), 16))
    N_P = _round_up(n_rois, tile_b)
    grid = (N_P // tile_b,)

    bf16 = jnp.bfloat16
    f32 = jnp.float32

    # ---- packed layer-1 weight: fine and bbox layer 1 share one (C_FINE_P, N1) MXU pass ----
    N1 = NZ_ROI_P + NZ_BOX_P
    w1 = jnp.zeros((C_FINE_P, N1), f32)
    w1 = w1.at[:nc_fine, :nz_roi].set(fine_p[0][0])
    # bbox layer 1 sees rois[:, 1:5] / 480 -> fold the 1/480 into its weight rows
    w1 = w1.at[nc_fine:nc_fine + 4, NZ_ROI_P:NZ_ROI_P + nz_box].set(bbox_p[0][0] * (1.0 / 480.0))
    w1 = w1.astype(bf16)
    b1 = jnp.zeros((1, N1), f32)
    b1 = b1.at[:, :nz_roi].set(fine_p[0][1])
    b1 = b1.at[:, NZ_ROI_P:NZ_ROI_P + nz_box].set(bbox_p[0][1])

    wf2 = _pad2(fine_p[1][0], NZ_ROI_P, NZ_ROI_P).astype(bf16)
    bf2 = _pad2(fine_p[1][1], 1, NZ_ROI_P)
    wb2 = _pad2(bbox_p[1][0], NZ_BOX_P, NZ_BOX_P).astype(bf16)
    bb2 = _pad2(bbox_p[1][1], 1, NZ_BOX_P)
    wb3 = _pad2(bbox_p[2][0], NZ_BOX_P, NZ_BOX_P).astype(bf16)
    bb3 = _pad2(bbox_p[2][1], 1, NZ_BOX_P)
    wc1 = _pad2(coarse_p[0][0], C_COARSE_P, NZ_COARSE_P).astype(bf16)
    bc1 = _pad2(coarse_p[0][1], 1, NZ_COARSE_P)
    wc2 = _pad2(coarse_p[1][0], NZ_COARSE_P, NZ_COARSE_P).astype(bf16)
    bc2 = _pad2(coarse_p[1][1], 1, NZ_COARSE_P)

    # joint layer-1 weight with its K blocks placed at the padded [fine | coarse | bbox] offsets
    KJ = NZ_ROI_P + NZ_COARSE_P + NZ_BOX_P
    wj1_t = joint_p[0][0]
    wj1 = jnp.zeros((KJ, NZ_JOINT_P), f32)
    wj1 = wj1.at[:nz_roi, :nz_joint].set(wj1_t[:nz_roi])
    wj1 = wj1.at[NZ_ROI_P:NZ_ROI_P + nz_coarse, :nz_joint].set(wj1_t[nz_roi:nz_roi + nz_coarse])
    wj1 = wj1.at[NZ_ROI_P + NZ_COARSE_P:NZ_ROI_P + NZ_COARSE_P + nz_box, :nz_joint].set(
        wj1_t[nz_roi + nz_coarse:])
    wj1 = wj1.astype(bf16)
    bj1 = _pad2(joint_p[0][1], 1, NZ_JOINT_P)
    wj2 = _pad2(joint_p[1][0], NZ_JOINT_P, NZ_JOINT_P).astype(bf16)
    bj2 = _pad2(joint_p[1][1], 1, NZ_JOINT_P)

    # ---- all biases collapsed into one f32 operand; kernel slices at static offsets --------
    bias_parts = {"b1": b1, "bf2": bf2, "bb2": bb2, "bb3": bb3,
                  "bc1": bc1, "bc2": bc2, "bj1": bj1, "bj2": bj2}
    bslc, chunks, off = {}, [], 0
    for name, b in bias_parts.items():
        bslc[name] = (off, b.shape[1])
        chunks.append(b)
        off += b.shape[1]
    bias_all = jnp.concatenate(chunks, axis=1)           # (1, total), every part 128-aligned

    # ---- streamed inputs (bf16): ROI features with /480-free coords in the spare lanes,
    #      plus a per-ROI one-hot row for the coarse-feature gather -------------------------
    fine_in = jnp.zeros((N_P, C_FINE_P), f32)
    fine_in = fine_in.at[:n_rois, :nc_fine].set(roi_img_feat.astype(f32))
    fine_in = fine_in.at[:n_rois, nc_fine:nc_fine + 4].set(rois[:, 1:5].astype(f32))
    fine_in = fine_in.astype(bf16)

    img_idx = jnp.zeros((N_P,), jnp.int32).at[:n_rois].set(
        jnp.round(rois[:, 0]).astype(jnp.int32))
    onehot_in = (img_idx[:, None] == jnp.arange(B_IMG_P)[None, :]).astype(bf16)

    coarse_in = _pad2(img_feat_coarse.astype(f32), B_IMG_P, C_COARSE_P).astype(bf16)

    # ---- pallas_call: ROI activations stream, everything else stays VMEM-resident ----------
    tile_map = lambda i: (i, 0)
    const_map = lambda i: (0, 0)

    consts = (w1, wf2, wb2, wb3, wc1, wc2, wj1, wj2, bias_all)
    in_specs = [
        pl.BlockSpec((tile_b, C_FINE_P), tile_map),
        pl.BlockSpec((tile_b, B_IMG_P), tile_map),
        pl.BlockSpec((B_IMG_P, C_COARSE_P), const_map),
    ] + [pl.BlockSpec(c.shape, const_map) for c in consts]

    out = pl.pallas_call(
        functools.partial(roi_encoder_kernel, use_context, NZ_ROI_P, bslc),
        out_shape=jax.ShapeDtypeStruct((N_P, NZ_JOINT_P), out_dtype),
        grid=grid,
        in_specs=in_specs,
        out_specs=pl.BlockSpec((tile_b, NZ_JOINT_P), tile_map),
        compiler_params=pltpu.CompilerParams(dimension_semantics=("parallel",)),
    )(fine_in, onehot_in, coarse_in, *consts)

    return out[:n_rois, :nz_joint]


# --------------------------------------------------------------------------------------
# deterministic synthetic parameters (PyTorch-style Linear + BatchNorm1d per fc layer)
# --------------------------------------------------------------------------------------
def make_fc_params(key, n_in, n_out):
    kw, kb, kg, kbt, km, kv = jax.random.split(key, 6)
    bound = float(n_in) ** -0.5
    W = jax.random.uniform(kw, (n_out, n_in), jnp.float32, -bound, bound)
    b = jax.random.uniform(kb, (n_out,), jnp.float32, -bound, bound)
    gamma = jax.random.uniform(kg, (n_out,), jnp.float32, 0.5, 1.5)
    beta = 0.1 * jax.random.normal(kbt, (n_out,), jnp.float32)
    mean = 0.1 * jax.random.normal(km, (n_out,), jnp.float32)
    var = jax.random.uniform(kv, (n_out,), jnp.float32, 0.5, 1.5)
    return (W, b, gamma, beta, mean, var)


def make_stack(key, n_in, n_out, nlayers):
    keys = jax.random.split(key, nlayers)
    return [make_fc_params(keys[l], n_in if l == 0 else n_out, n_out) for l in range(nlayers)]


if __name__ == "__main__":
    key = jax.random.PRNGKey(0)
    k_fine, k_coarse, k_box, k_idx, k_params = jax.random.split(key, 5)

    # small-but-representative shapes (module defaults scaled down)
    n_rois, n_imgs = 300, 2
    nc_inp_fine, nc_inp_coarse = 64, 96
    nz_roi, nz_coarse, nz_box, nz_joint = 64, 64, 32, 128

    roi_img_feat = jax.random.normal(k_fine, (n_rois, nc_inp_fine), jnp.float32)
    img_feat_coarse = jax.random.normal(k_coarse, (n_imgs, nc_inp_coarse), jnp.float32)
    boxes = jax.random.uniform(k_box, (n_rois, 4), jnp.float32, 0.0, 480.0)
    img_idx = jax.random.randint(k_idx, (n_rois, 1), 0, n_imgs).astype(jnp.float32)
    rois = jnp.concatenate([img_idx, boxes], axis=1)           # (n_rois, 5)

    kf, kc, kb, kj = jax.random.split(k_params, 4)
    params = {
        "fine": make_stack(kf, nc_inp_fine, nz_roi, 2),
        "coarse": make_stack(kc, nc_inp_coarse, nz_coarse, 2),
        "bbox": make_stack(kb, 4, nz_box, 3),
        "joint": make_stack(kj, nz_roi + nz_coarse + nz_box, nz_joint, 2),
    }

    out = roi_encoder_forward(roi_img_feat, img_feat_coarse, rois, params)
    out = jax.block_until_ready(out)

    # pure-JAX f32 reference reproducing the PyTorch forward (inference-mode BN)
    def fc_ref(x, p):
        W, b, gamma, beta, mean, var = p
        h = x @ W.T + b
        h = (h - mean) / jnp.sqrt(var + 1e-5) * gamma + beta
        return jnp.where(h >= 0.0, h, 0.2 * h)

    def stack_ref(x, layers):
        for p in layers:
            x = fc_ref(x, p)
        return x

    f_fine = stack_ref(roi_img_feat, params["fine"])
    f_coarse = stack_ref(img_feat_coarse, params["coarse"])
    f_bbox = stack_ref(rois[:, 1:5] / 480.0, params["bbox"])
    f_coarse_rep = f_coarse[rois[:, 0].astype(jnp.int32)]
    ref = stack_ref(jnp.concatenate([f_fine, f_coarse_rep, f_bbox], axis=1), params["joint"])

    assert out.shape == (n_rois, nz_joint)
    max_err = float(jnp.max(jnp.abs(out - ref)))
    assert jnp.allclose(out, ref, atol=5e-2, rtol=5e-2), f"max abs err {max_err}"
    print("KERNEL_OK")
</pallas_src>

<mosaic_0001>
module attributes {stable_mosaic.version = 11 : i64} {
  func.func @roi_encoder_kernel(%arg0: i32, %arg1: memref<160x128xbf16, #tpu.memory_space<vmem>>, %arg2: memref<160x8xbf16, #tpu.memory_space<vmem>>, %arg3: memref<8x128xbf16, #tpu.memory_space<vmem>>, %arg4: memref<128x256xbf16, #tpu.memory_space<vmem>>, %arg5: memref<128x128xbf16, #tpu.memory_space<vmem>>, %arg6: memref<128x128xbf16, #tpu.memory_space<vmem>>, %arg7: memref<128x128xbf16, #tpu.memory_space<vmem>>, %arg8: memref<128x128xbf16, #tpu.memory_space<vmem>>, %arg9: memref<128x128xbf16, #tpu.memory_space<vmem>>, %arg10: memref<384x128xbf16, #tpu.memory_space<vmem>>, %arg11: memref<128x128xbf16, #tpu.memory_space<vmem>>, %arg12: memref<1x1152xf32, #tpu.memory_space<vmem>>, %arg13: memref<160x128xf32, #tpu.memory_space<vmem>>) attributes {dimension_semantics = [#tpu.dimension_semantics<parallel>], iteration_bounds = array<i64: 2>, scalar_prefetch = 0 : i64, scratch_operands = 0 : i64, tpu.core_type = #tpu.core_type<tc>, window_params = [{transform_indices = @transform_0, window_bounds = array<i64: 160, 128>}, {transform_indices = @transform_1, window_bounds = array<i64: 160, 8>}, {pipeline_mode = #tpu.pipeline_mode<synchronous>, transform_indices = @transform_2, window_bounds = array<i64: 8, 128>}, {pipeline_mode = #tpu.pipeline_mode<synchronous>, transform_indices = @transform_3, window_bounds = array<i64: 128, 256>}, {pipeline_mode = #tpu.pipeline_mode<synchronous>, transform_indices = @transform_4, window_bounds = array<i64: 128, 128>}, {pipeline_mode = #tpu.pipeline_mode<synchronous>, transform_indices = @transform_5, window_bounds = array<i64: 128, 128>}, {pipeline_mode = #tpu.pipeline_mode<synchronous>, transform_indices = @transform_6, window_bounds = array<i64: 128, 128>}, {pipeline_mode = #tpu.pipeline_mode<synchronous>, transform_indices = @transform_7, window_bounds = array<i64: 128, 128>}, {pipeline_mode = #tpu.pipeline_mode<synchronous>, transform_indices = @transform_8, window_bounds = array<i64: 128, 128>}, {pipeline_mode = #tpu.pipeline_mode<synchronous>, transform_indices = @transform_9, window_bounds = array<i64: 384, 128>}, {pipeline_mode = #tpu.pipeline_mode<synchronous>, transform_indices = @transform_10, window_bounds = array<i64: 128, 128>}, {pipeline_mode = #tpu.pipeline_mode<synchronous>, transform_indices = @transform_11, window_bounds = array<i64: 1, 1152>}, {transform_indices = @transform_12, window_bounds = array<i64: 160, 128>}]} {
    %c0 = arith.constant 0 : index
    %c0_0 = arith.constant 0 : index
    %0 = vector.load %arg1[%c0, %c0_0] : memref<160x128xbf16, #tpu.memory_space<vmem>>, vector<160x128xbf16>
    %c0_1 = arith.constant 0 : index
    %c0_2 = arith.constant 0 : index
    %1 = vector.load %arg4[%c0_1, %c0_2] : memref<128x256xbf16, #tpu.memory_space<vmem>>, vector<128x256xbf16>
    %cst = arith.constant dense<0.000000e+00> : vector<160x256xf32>
    %2 = tpu.matmul %0, %1, %cst {dimension_numbers = #tpu.dot_dimension_numbers<[1], [0], [0], [1], [0, 0, 1, 1], [], []>} : vector<160x128xbf16>, vector<128x256xbf16>, vector<160x256xf32> -> vector<160x256xf32>
    %c0_3 = arith.constant 0 : index
    %c0_4 = arith.constant 0 : index
    %3 = vector.load %arg12[%c0_3, %c0_4] : memref<1x1152xf32, #tpu.memory_space<vmem>>, vector<1x256xf32>
    %4 = vector.broadcast %3 : vector<1x256xf32> to vector<160x256xf32>
    %5 = arith.addf %2, %4 : vector<160x256xf32>
    %cst_5 = arith.constant 2.000000e-01 : f32
    %6 = vector.broadcast %cst_5 : f32 to vector<160x256xf32>
    %7 = arith.mulf %6, %5 : vector<160x256xf32>
    %8 = arith.maximumf %5, %7 : vector<160x256xf32>
    %9 = arith.truncf %8 : vector<160x256xf32> to vector<160x256xbf16>
    %10 = vector.extract_strided_slice %9 {offsets = [0, 0], sizes = [160, 128], strides = [1, 1]} : vector<160x256xbf16> to vector<160x128xbf16>
    %11 = vector.extract_strided_slice %9 {offsets = [0, 128], sizes = [160, 128], strides = [1, 1]} : vector<160x256xbf16> to vector<160x128xbf16>
    %c0_6 = arith.constant 0 : index
    %c0_7 = arith.constant 0 : index
    %12 = vector.load %arg5[%c0_6, %c0_7] : memref<128x128xbf16, #tpu.memory_space<vmem>>, vector<128x128xbf16>
    %cst_8 = arith.constant dense<0.000000e+00> : vector<160x128xf32>
    %13 = tpu.matmul %10, %12, %cst_8 {dimension_numbers = #tpu.dot_dimension_numbers<[1], [0], [0], [1], [0, 0, 1, 1], [], []>} : vector<160x128xbf16>, vector<128x128xbf16>, vector<160x128xf32> -> vector<160x128xf32>
    %c0_9 = arith.constant 0 : index
    %c256 = arith.constant 256 : index
    %14 = vector.load %arg12[%c0_9, %c256] : memref<1x1152xf32, #tpu.memory_space<vmem>>, vector<1x128xf32>
    %15 = vector.broadcast %14 : vector<1x128xf32> to vector<160x128xf32>
    %16 = arith.addf %13, %15 : vector<160x128xf32>
    %cst_10 = arith.constant 2.000000e-01 : f32
    %17 = vector.broadcast %cst_10 : f32 to vector<160x128xf32>
    %18 = arith.mulf %17, %16 : vector<160x128xf32>
    %19 = arith.maximumf %16, %18 : vector<160x128xf32>
    %20 = arith.truncf %19 : vector<160x128xf32> to vector<160x128xbf16>
    %c0_11 = arith.constant 0 : index
    %c0_12 = arith.constant 0 : index
    %21 = vector.load %arg6[%c0_11, %c0_12] : memref<128x128xbf16, #tpu.memory_space<vmem>>, vector<128x128xbf16>
    %cst_13 = arith.constant dense<0.000000e+00> : vector<160x128xf32>
    %22 = tpu.matmul %11, %21, %cst_13 {dimension_numbers = #tpu.dot_dimension_numbers<[1], [0], [0], [1], [0, 0, 1, 1], [], []>} : vector<160x128xbf16>, vector<128x128xbf16>, vector<160x128xf32> -> vector<160x128xf32>
    %c0_14 = arith.constant 0 : index
    %c384 = arith.constant 384 : index
    %23 = vector.load %arg12[%c0_14, %c384] : memref<1x1152xf32, #tpu.memory_space<vmem>>, vector<1x128xf32>
    %24 = vector.broadcast %23 : vector<1x128xf32> to vector<160x128xf32>
    %25 = arith.addf %22, %24 : vector<160x128xf32>
    %cst_15 = arith.constant 2.000000e-01 : f32
    %26 = vector.broadcast %cst_15 : f32 to vector<160x128xf32>
    %27 = arith.mulf %26, %25 : vector<160x128xf32>
    %28 = arith.maximumf %25, %27 : vector<160x128xf32>
    %29 = arith.truncf %28 : vector<160x128xf32> to vector<160x128xbf16>
    %c0_16 = arith.constant 0 : index
    %c0_17 = arith.constant 0 : index
    %30 = vector.load %arg7[%c0_16, %c0_17] : memref<128x128xbf16, #tpu.memory_space<vmem>>, vector<128x128xbf16>
    %cst_18 = arith.constant dense<0.000000e+00> : vector<160x128xf32>
    %31 = tpu.matmul %29, %30, %cst_18 {dimension_numbers = #tpu.dot_dimension_numbers<[1], [0], [0], [1], [0, 0, 1, 1], [], []>} : vector<160x128xbf16>, vector<128x128xbf16>, vector<160x128xf32> -> vector<160x128xf32>
    %c0_19 = arith.constant 0 : index
    %c512 = arith.constant 512 : index
    %32 = vector.load %arg12[%c0_19, %c512] : memref<1x1152xf32, #tpu.memory_space<vmem>>, vector<1x128xf32>
    %33 = vector.broadcast %32 : vector<1x128xf32> to vector<160x128xf32>
    %34 = arith.addf %31, %33 : vector<160x128xf32>
    %cst_20 = arith.constant 2.000000e-01 : f32
    %35 = vector.broadcast %cst_20 : f32 to vector<160x128xf32>
    %36 = arith.mulf %35, %34 : vector<160x128xf32>
    %37 = arith.maximumf %34, %36 : vector<160x128xf32>
    %38 = arith.truncf %37 : vector<160x128xf32> to vector<160x128xbf16>
    %c0_21 = arith.constant 0 : index
    %c0_22 = arith.constant 0 : index
    %39 = vector.load %arg3[%c0_21, %c0_22] : memref<8x128xbf16, #tpu.memory_space<vmem>>, vector<8x128xbf16>
    %c0_23 = arith.constant 0 : index
    %c0_24 = arith.constant 0 : index
    %40 = vector.load %arg8[%c0_23, %c0_24] : memref<128x128xbf16, #tpu.memory_space<vmem>>, vector<128x128xbf16>
    %cst_25 = arith.constant dense<0.000000e+00> : vector<8x128xf32>
    %41 = tpu.matmul %39, %40, %cst_25 {dimension_numbers = #tpu.dot_dimension_numbers<[1], [0], [0], [1], [0, 0, 1, 1], [], []>} : vector<8x128xbf16>, vector<128x128xbf16>, vector<8x128xf32> -> vector<8x128xf32>
    %c0_26 = arith.constant 0 : index
    %c640 = arith.constant 640 : index
    %42 = vector.load %arg12[%c0_26, %c640] : memref<1x1152xf32, #tpu.memory_space<vmem>>, vector<1x128xf32>
    %43 = vector.broadcast %42 : vector<1x128xf32> to vector<8x128xf32>
    %44 = arith.addf %41, %43 : vector<8x128xf32>
    %cst_27 = arith.constant 2.000000e-01 : f32
    %45 = vector.broadcast %cst_27 : f32 to vector<8x128xf32>
    %46 = arith.mulf %45, %44 : vector<8x128xf32>
    %47 = arith.maximumf %44, %46 : vector<8x128xf32>
    %48 = arith.truncf %47 : vector<8x128xf32> to vector<8x128xbf16>
    %c0_28 = arith.constant 0 : index
    %c0_29 = arith.constant 0 : index
    %49 = vector.load %arg9[%c0_28, %c0_29] : memref<128x128xbf16, #tpu.memory_space<vmem>>, vector<128x128xbf16>
    %cst_30 = arith.constant dense<0.000000e+00> : vector<8x128xf32>
    %50 = tpu.matmul %48, %49, %cst_30 {dimension_numbers = #tpu.dot_dimension_numbers<[1], [0], [0], [1], [0, 0, 1, 1], [], []>} : vector<8x128xbf16>, vector<128x128xbf16>, vector<8x128xf32> -> vector<8x128xf32>
    %c0_31 = arith.constant 0 : index
    %c768 = arith.constant 768 : index
    %51 = vector.load %arg12[%c0_31, %c768] : memref<1x1152xf32, #tpu.memory_space<vmem>>, vector<1x128xf32>
    %52 = vector.broadcast %51 : vector<1x128xf32> to vector<8x128xf32>
    %53 = arith.addf %50, %52 : vector<8x128xf32>
    %cst_32 = arith.constant 2.000000e-01 : f32
    %54 = vector.broadcast %cst_32 : f32 to vector<8x128xf32>
    %55 = arith.mulf %54, %53 : vector<8x128xf32>
    %56 = arith.maximumf %53, %55 : vector<8x128xf32>
    %57 = arith.truncf %56 : vector<8x128xf32> to vector<8x128xbf16>
    %c0_33 = arith.constant 0 : index
    %c0_34 = arith.constant 0 : index
    %58 = vector.load %arg2[%c0_33, %c0_34] : memref<160x8xbf16, #tpu.memory_space<vmem>>, vector<160x8xbf16>
    %cst_35 = arith.constant dense<0.000000e+00> : vector<160x128xf32>
    %59 = tpu.matmul %58, %57, %cst_35 {dimension_numbers = #tpu.dot_dimension_numbers<[1], [0], [0], [1], [0, 0, 1, 1], [], []>} : vector<160x8xbf16>, vector<8x128xbf16>, vector<160x128xf32> -> vector<160x128xf32>
    %60 = arith.truncf %59 : vector<160x128xf32> to vector<160x128xbf16>
    %61 = tpu.concatenate %20, %60, %38 in 1 : vector<160x128xbf16>, vector<160x128xbf16>, vector<160x128xbf16> -> vector<160x384xbf16>
    %c0_36 = arith.constant 0 : index
    %c0_37 = arith.constant 0 : index
    %62 = vector.load %arg10[%c0_36, %c0_37] : memref<384x128xbf16, #tpu.memory_space<vmem>>, vector<384x128xbf16>
    %cst_38 = arith.constant dense<0.000000e+00> : vector<160x128xf32>
    %63 = tpu.matmul %61, %62, %cst_38 {dimension_numbers = #tpu.dot_dimension_numbers<[1], [0], [0], [1], [0, 0, 1, 1], [], []>} : vector<160x384xbf16>, vector<384x128xbf16>, vector<160x128xf32> -> vector<160x128xf32>
    %c0_39 = arith.constant 0 : index
    %c896 = arith.constant 896 : index
    %64 = vector.load %arg12[%c0_39, %c896] : memref<1x1152xf32, #tpu.memory_space<vmem>>, vector<1x128xf32>
    %65 = vector.broadcast %64 : vector<1x128xf32> to vector<160x128xf32>
    %66 = arith.addf %63, %65 : vector<160x128xf32>
    %cst_40 = arith.constant 2.000000e-01 : f32
    %67 = vector.broadcast %cst_40 : f32 to vector<160x128xf32>
    %68 = arith.mulf %67, %66 : vector<160x128xf32>
    %69 = arith.maximumf %66, %68 : vector<160x128xf32>
    %70 = arith.truncf %69 : vector<160x128xf32> to vector<160x128xbf16>
    %c0_41 = arith.constant 0 : index
    %c0_42 = arith.constant 0 : index
    %71 = vector.load %arg11[%c0_41, %c0_42] : memref<128x128xbf16, #tpu.memory_space<vmem>>, vector<128x128xbf16>
    %cst_43 = arith.constant dense<0.000000e+00> : vector<160x128xf32>
    %72 = tpu.matmul %70, %71, %cst_43 {dimension_numbers = #tpu.dot_dimension_numbers<[1], [0], [0], [1], [0, 0, 1, 1], [], []>} : vector<160x128xbf16>, vector<128x128xbf16>, vector<160x128xf32> -> vector<160x128xf32>
    %c0_44 = arith.constant 0 : index
    %c1024 = arith.constant 1024 : index
    %73 = vector.load %arg12[%c0_44, %c1024] : memref<1x1152xf32, #tpu.memory_space<vmem>>, vector<1x128xf32>
    %74 = vector.broadcast %73 : vector<1x128xf32> to vector<160x128xf32>
    %75 = arith.addf %72, %74 : vector<160x128xf32>
    %cst_45 = arith.constant 2.000000e-01 : f32
    %76 = vector.broadcast %cst_45 : f32 to vector<160x128xf32>
    %77 = arith.mulf %76, %75 : vector<160x128xf32>
    %78 = arith.maximumf %75, %77 : vector<160x128xf32>
    %c0_46 = arith.constant 0 : index
    %c0_47 = arith.constant 0 : index
    %79 = vector.load %arg13[%c0_46, %c0_47] : memref<160x128xf32, #tpu.memory_space<vmem>>, vector<160x128xf32>
    tpu.vector_store %arg13[%c0_46, %c0_47], %78 {strides = array<i32>} : memref<160x128xf32, #tpu.memory_space<vmem>>, vector<160x128xf32>,
    return
  }
  func.func @transform_0(%arg0: i32) -> (i32, i32) {
    %c0_i32 = arith.constant 0 : i32
    %c0_i32_0 = arith.constant 0 : i32
    return %arg0, %c0_i32 : i32, i32
  }
  func.func @transform_1(%arg0: i32) -> (i32, i32) {
    %c0_i32 = arith.constant 0 : i32
    %c0_i32_0 = arith.constant 0 : i32
    return %arg0, %c0_i32 : i32, i32
  }
  func.func @transform_2(%arg0: i32) -> (i32, i32) {
    %c0_i32 = arith.constant 0 : i32
    %c0_i32_0 = arith.constant 0 : i32
    %c0_i32_1 = arith.constant 0 : i32
    return %c0_i32, %c0_i32_0 : i32, i32
  }
  func.func @transform_3(%arg0: i32) -> (i32, i32) {
    %c0_i32 = arith.constant 0 : i32
    %c0_i32_0 = arith.constant 0 : i32
    %c0_i32_1 = arith.constant 0 : i32
    return %c0_i32, %c0_i32_0 : i32, i32
  }
  func.func @transform_4(%arg0: i32) -> (i32, i32) {
    %c0_i32 = arith.constant 0 : i32
    %c0_i32_0 = arith.constant 0 : i32
    %c0_i32_1 = arith.constant 0 : i32
    return %c0_i32, %c0_i32_0 : i32, i32
  }
  func.func @transform_5(%arg0: i32) -> (i32, i32) {
    %c0_i32 = arith.constant 0 : i32
    %c0_i32_0 = arith.constant 0 : i32
    %c0_i32_1 = arith.constant 0 : i32
    return %c0_i32, %c0_i32_0 : i32, i32
  }
  func.func @transform_6(%arg0: i32) -> (i32, i32) {
    %c0_i32 = arith.constant 0 : i32
    %c0_i32_0 = arith.constant 0 : i32
    %c0_i32_1 = arith.constant 0 : i32
    return %c0_i32, %c0_i32_0 : i32, i32
  }
  func.func @transform_7(%arg0: i32) -> (i32, i32) {
    %c0_i32 = arith.constant 0 : i32
    %c0_i32_0 = arith.constant 0 : i32
    %c0_i32_1 = arith.constant 0 : i32
    return %c0_i32, %c0_i32_0 : i32, i32
  }
  func.func @transform_8(%arg0: i32) -> (i32, i32) {
    %c0_i32 = arith.constant 0 : i32
    %c0_i32_0 = arith.constant 0 : i32
    %c0_i32_1 = arith.constant 0 : i32
    return %c0_i32, %c0_i32_0 : i32, i32
  }
  func.func @transform_9(%arg0: i32) -> (i32, i32) {
    %c0_i32 = arith.constant 0 : i32
    %c0_i32_0 = arith.constant 0 : i32
    %c0_i32_1 = arith.constant 0 : i32
    return %c0_i32, %c0_i32_0 : i32, i32
  }
  func.func @transform_10(%arg0: i32) -> (i32, i32) {
    %c0_i32 = arith.constant 0 : i32
    %c0_i32_0 = arith.constant 0 : i32
    %c0_i32_1 = arith.constant 0 : i32
    return %c0_i32, %c0_i32_0 : i32, i32
  }
  func.func @transform_11(%arg0: i32) -> (i32, i32) {
    %c0_i32 = arith.constant 0 : i32
    %c0_i32_0 = arith.constant 0 : i32
    %c0_i32_1 = arith.constant 0 : i32
    return %c0_i32, %c0_i32_0 : i32, i32
  }
  func.func @transform_12(%arg0: i32) -> (i32, i32) {
    %c0_i32 = arith.constant 0 : i32
    %c0_i32_0 = arith.constant 0 : i32
    return %arg0, %c0_i32 : i32, i32
  }
}

</mosaic_0001>

<llo_original>
// kernel: tpu_custom_call.1
$region0: #{tpu_custom_call.1}
  #allocation0 [shape = 'u32[]', space=smem, size = 0x4, offset = 0x4, fixed_abs, tag = 'smem constant byte address 0x4 - core index']
  #allocation1 [shape = 'u32[72,128]{1,0:T(1,128)}', space=vmem, size = 0x9000, scoped, tag = 'internal scratch']
  %s0 = inlined_call_operand.vmem [shape: bf16[320,128], index: 0, kind: input, shape index: {}]
  %s1 = inlined_call_operand.vmem [shape: bf16[320,8], index: 1, kind: input, shape index: {}]
  %s2 = inlined_call_operand.vmem [shape: bf16[8,128], index: 2, kind: input, shape index: {}]
  %s3 = inlined_call_operand.hbm [shape: bf16[128,256], index: 3, kind: input, shape index: {}]
  %s4 = inlined_call_operand.hbm [shape: bf16[128,128], index: 4, kind: input, shape index: {}]
  %s5 = inlined_call_operand.hbm [shape: bf16[128,128], index: 5, kind: input, shape index: {}]
  %s6 = inlined_call_operand.hbm [shape: bf16[128,128], index: 6, kind: input, shape index: {}]
  %s7 = inlined_call_operand.hbm [shape: bf16[128,128], index: 7, kind: input, shape index: {}]
  %s8 = inlined_call_operand.hbm [shape: bf16[128,128], index: 8, kind: input, shape index: {}]
  %s9 = inlined_call_operand.hbm [shape: bf16[384,128], index: 9, kind: input, shape index: {}]
  %s10 = inlined_call_operand.hbm [shape: bf16[128,128], index: 10, kind: input, shape index: {}]
  %s11 = inlined_call_operand.vmem [shape: f32[1,1152], index: 11, kind: input, shape index: {}]
  %s12 = inlined_call_operand.hbm [shape: f32[320,128], index: 12, kind: output, shape index: {}]
  %s13 = sld [smem:[#allocation0]]
  $region113: #{tpu_custom_call.1} parent=0
    _
  %s15 = ssub.s32 1, %s13
  %s16 = scalar_select 0, %s15, %s13
  $region1: #{tpu_custom_call.1} parent=0
    #allocation2 [shape = 'u8[65536]{0}', space=vmem, size = 0x10000, scoped, tag = 'input window, operand 3, single buffered']
    #allocation3 [shape = 's32[2]{0}', space=sflag, size = 0x8, scoped, tag = 'scoped memory for tpu_custom_call.1']
    #allocation4 [shape = 's32[2]{0}', space=sflag, size = 0x8, scoped, tag = 'scoped memory for tpu_custom_call.1']
    #allocation5 [shape = 'u8[32768]{0}', space=vmem, size = 0x8000, scoped, tag = 'input window, operand 4, single buffered']
    #allocation6 [shape = 's32[1]{0}', space=sflag, size = 0x4, scoped, tag = 'scoped memory for tpu_custom_call.1']
    #allocation7 [shape = 'u8[32768]{0}', space=vmem, size = 0x8000, scoped, tag = 'input window, operand 5, single buffered']
    #allocation8 [shape = 'u8[32768]{0}', space=vmem, size = 0x8000, scoped, tag = 'input window, operand 6, single buffered']
    #allocation9 [shape = 's32[1]{0}', space=sflag, size = 0x4, scoped, tag = 'scoped memory for tpu_custom_call.1']
    #allocation10 [shape = 'u8[32768]{0}', space=vmem, size = 0x8000, scoped, tag = 'input window, operand 7, single buffered']
    #allocation11 [shape = 'u8[32768]{0}', space=vmem, size = 0x8000, scoped, tag = 'input window, operand 8, single buffered']
    #allocation12 [shape = 's32[1]{0}', space=sflag, size = 0x4, scoped, tag = 'scoped memory for tpu_custom_call.1']
    #allocation13 [shape = 'u8[98304]{0}', space=vmem, size = 0x18000, scoped, tag = 'input window, operand 9, single buffered']
    #allocation14 [shape = 'u8[32768]{0}', space=vmem, size = 0x8000, scoped, tag = 'input window, operand 10, single buffered']
    #allocation15 [shape = 's32[1]{0}', space=sflag, size = 0x4, scoped, tag = 'scoped memory for tpu_custom_call.1']
    #allocation16 [shape = 'u8[163840]{0}', space=vmem, size = 0x28000, scoped, tag = 'output window, operand 0']
    %17 = vsyncpa [#allocation3], 0
    %18 = vsyncpa [#allocation6], 0
    %19 = vsyncpa [#allocation9], 0
    %20 = vsyncpa [#allocation12], 0
    %21 = vsyncpa [#allocation15], 0
    %22 = vsyncpa [#allocation4], 0
    %s23 = scalar_lea.sflag [#allocation4], 1
    %24 = vsyncpa %s23, 0
    loop: start=0, step=1, limit=4
    $region2: #{tpu_custom_call.1} parent=1 // loop_pre_header
      _
    $region3: #{tpu_custom_call.1} parent=1 // loop_header
      %s26 = sphi 0, %s30
      %p27 = scmp.ge.s32.totalorder %s26, 4
      %s36 = sphi 0, %s38
      %s39 = sphi 0, %s36
      %s40 = sphi 0, %s39
      %s56 = sphi 0, %s40
      %s62 = sphi 0, %s64
      %s65 = sphi 0, %s62
      %s66 = sphi 0, %s65
      %s82 = sphi 0, %s66
      %s86 = sphi 0, %s86
      %s88 = sphi 0, %s86
      %s89 = sphi 0, %s88
      %s103 = sphi 0, %s89
      %s107 = sphi 0, %s107
      %s109 = sphi 0, %s107
      %s110 = sphi 0, %s109
      %s124 = sphi 0, %s110
      %s128 = sphi 0, %s128
      %s130 = sphi 0, %s128
      %s131 = sphi 0, %s130
      %s145 = sphi 0, %s131
      %s149 = sphi 0, %s149
      %s151 = sphi 0, %s149
      %s152 = sphi 0, %s151
      %s166 = sphi 0, %s152
      %s170 = sphi 0, %s170
      %s172 = sphi 0, %s170
      %s173 = sphi 0, %s172
      %s187 = sphi 0, %s173
      %s191 = sphi 0, %s191
      %s193 = sphi 0, %s191
      %s194 = sphi 0, %s193
      %s208 = sphi 0, %s194
      %s212 = sphi 0, %s212
      %s214 = sphi 0, %s212
      %s215 = sphi 0, %s214
      %s229 = sphi 0, %s215
      %s233 = sphi 0, %s233
      %s235 = sphi 0, %s233
      %s236 = sphi 0, %s235
      %s250 = sphi 0, %s236
      %s254 = sphi 0, %s254
      %s256 = sphi 0, %s254
      %s257 = sphi 0, %s256
      %s271 = sphi 0, %s257
      %s275 = sphi 0, %s275
      %s277 = sphi 0, %s275
      %s278 = sphi 0, %s277
      %s292 = sphi 0, %s278
      %s298 = sphi 0, %s300
      %s301 = sphi 0, %s298
      %s302 = sphi 0, %s301
      %s318 = sphi 0, %s302
    $region4: #{tpu_custom_call.1} parent=1 // loop_header_branch
      %29 = sbr.rel (%p27) target = $region8
    $region5: #{tpu_custom_call.1} parent=1 // loop_body
      %s31 = ssub.s32 %s26, 1
      %s32 = ssub.s32 %s26, 2
      %s33 = sadd.s32 %s26, 1
      %s34 = ssub.s32 %s26, %s33
      %p35 = scmp.eq.s32.totalorder %s34, 0
      %s37 = sadd.s32 %s36, 1
      %s38 = scalar_select %p35, %s36, %s37
      %p41 = pneg %p35
      %p42 = scmp.eq.s32.totalorder %s26, 1
      %p43 = por %p41, %p42
      %p44 = scmp.ne.s32.totalorder %s36, %s39
      %p45 = scmp.eq.s32.totalorder %s26, 0
      %p46 = por %p44, %p45
      %p47 = scmp.ne.s32.totalorder %s36, %s39
      %p48 = scmp.eq.s32.totalorder %s31, 1
      %p49 = por %p47, %p48
      %p50 = scmp.ne.s32.totalorder %s39, %s40
      %p51 = scmp.eq.s32.totalorder %s31, 0
      %p52 = por %p50, %p51
      %p53 = scmp.ne.s32.totalorder %s39, %s40
      %p54 = scmp.eq.s32.totalorder %s32, 1
      %p55 = por %p53, %p54
      %p57 = scmp.ne.s32.totalorder %s40, %s56
      %p58 = scmp.eq.s32.totalorder %s32, 0
      %p59 = por %p57, %p58
      %s60 = ssub.s32 %s26, %s33
      %p61 = scmp.eq.s32.totalorder %s60, 0
      %s63 = sadd.s32 %s62, 1
      %s64 = scalar_select %p61, %s62, %s63
      %p67 = pneg %p61
      %p68 = scmp.eq.s32.totalorder %s26, 1
      %p69 = por %p67, %p68
      %p70 = scmp.ne.s32.totalorder %s62, %s65
      %p71 = scmp.eq.s32.totalorder %s26, 0
      %p72 = por %p70, %p71
      %p73 = scmp.ne.s32.totalorder %s62, %s65
      %p74 = scmp.eq.s32.totalorder %s31, 1
      %p75 = por %p73, %p74
      %p76 = scmp.ne.s32.totalorder %s65, %s66
      %p77 = scmp.eq.s32.totalorder %s31, 0
      %p78 = por %p76, %p77
      %p79 = scmp.ne.s32.totalorder %s65, %s66
      %p80 = scmp.eq.s32.totalorder %s32, 1
      %p81 = por %p79, %p80
      %p83 = scmp.ne.s32.totalorder %s66, %s82
      %p84 = scmp.eq.s32.totalorder %s32, 0
      %p85 = por %p83, %p84
      %s87 = sadd.s32 %s86, 1
      %p90 = scmp.eq.s32.totalorder %s26, 1
      %p91 = scmp.ne.s32.totalorder %s86, %s88
      %p92 = scmp.eq.s32.totalorder %s26, 0
      %p93 = por %p91, %p92
      %p94 = scmp.ne.s32.totalorder %s86, %s88
      %p95 = scmp.eq.s32.totalorder %s31, 1
      %p96 = por %p94, %p95
      %p97 = scmp.ne.s32.totalorder %s88, %s89
      %p98 = scmp.eq.s32.totalorder %s31, 0
      %p99 = por %p97, %p98
      %p100 = scmp.ne.s32.totalorder %s88, %s89
      %p101 = scmp.eq.s32.totalorder %s32, 1
      %p102 = por %p100, %p101
      %p104 = scmp.ne.s32.totalorder %s89, %s103
      %p105 = scmp.eq.s32.totalorder %s32, 0
      %p106 = por %p104, %p105
      %s108 = sadd.s32 %s107, 1
      %p111 = scmp.eq.s32.totalorder %s26, 1
      %p112 = scmp.ne.s32.totalorder %s107, %s109
      %p113 = scmp.eq.s32.totalorder %s26, 0
      %p114 = por %p112, %p113
      %p115 = scmp.ne.s32.totalorder %s107, %s109
      %p116 = scmp.eq.s32.totalorder %s31, 1
      %p117 = por %p115, %p116
      %p118 = scmp.ne.s32.totalorder %s109, %s110
      %p119 = scmp.eq.s32.totalorder %s31, 0
      %p120 = por %p118, %p119
      %p121 = scmp.ne.s32.totalorder %s109, %s110
      %p122 = scmp.eq.s32.totalorder %s32, 1
      %p123 = por %p121, %p122
      %p125 = scmp.ne.s32.totalorder %s110, %s124
      %p126 = scmp.eq.s32.totalorder %s32, 0
      %p127 = por %p125, %p126
      %s129 = sadd.s32 %s128, 1
      %p132 = scmp.eq.s32.totalorder %s26, 1
      %p133 = scmp.ne.s32.totalorder %s128, %s130
      %p134 = scmp.eq.s32.totalorder %s26, 0
      %p135 = por %p133, %p134
      %p136 = scmp.ne.s32.totalorder %s128, %s130
      %p137 = scmp.eq.s32.totalorder %s31, 1
      %p138 = por %p136, %p137
      %p139 = scmp.ne.s32.totalorder %s130, %s131
      %p140 = scmp.eq.s32.totalorder %s31, 0
      %p141 = por %p139, %p140
      %p142 = scmp.ne.s32.totalorder %s130, %s131
      %p143 = scmp.eq.s32.totalorder %s32, 1
      %p144 = por %p142, %p143
      %p146 = scmp.ne.s32.totalorder %s131, %s145
      %p147 = scmp.eq.s32.totalorder %s32, 0
      %p148 = por %p146, %p147
      %s150 = sadd.s32 %s149, 1
      %p153 = scmp.eq.s32.totalorder %s26, 1
      %p154 = scmp.ne.s32.totalorder %s149, %s151
      %p155 = scmp.eq.s32.totalorder %s26, 0
      %p156 = por %p154, %p155
      %p157 = scmp.ne.s32.totalorder %s149, %s151
      %p158 = scmp.eq.s32.totalorder %s31, 1
      %p159 = por %p157, %p158
      %p160 = scmp.ne.s32.totalorder %s151, %s152
      %p161 = scmp.eq.s32.totalorder %s31, 0
      %p162 = por %p160, %p161
      %p163 = scmp.ne.s32.totalorder %s151, %s152
      %p164 = scmp.eq.s32.totalorder %s32, 1
      %p165 = por %p163, %p164
      %p167 = scmp.ne.s32.totalorder %s152, %s166
      %p168 = scmp.eq.s32.totalorder %s32, 0
      %p169 = por %p167, %p168
      %s171 = sadd.s32 %s170, 1
      %p174 = scmp.eq.s32.totalorder %s26, 1
      %p175 = scmp.ne.s32.totalorder %s170, %s172
      %p176 = scmp.eq.s32.totalorder %s26, 0
      %p177 = por %p175, %p176
      %p178 = scmp.ne.s32.totalorder %s170, %s172
      %p179 = scmp.eq.s32.totalorder %s31, 1
      %p180 = por %p178, %p179
      %p181 = scmp.ne.s32.totalorder %s172, %s173
      %p182 = scmp.eq.s32.totalorder %s31, 0
      %p183 = por %p181, %p182
      %p184 = scmp.ne.s32.totalorder %s172, %s173
      %p185 = scmp.eq.s32.totalorder %s32, 1
      %p186 = por %p184, %p185
      %p188 = scmp.ne.s32.totalorder %s173, %s187
      %p189 = scmp.eq.s32.totalorder %s32, 0
      %p190 = por %p188, %p189
      %s192 = sadd.s32 %s191, 1
      %p195 = scmp.eq.s32.totalorder %s26, 1
      %p196 = scmp.ne.s32.totalorder %s191, %s193
      %p197 = scmp.eq.s32.totalorder %s26, 0
      %p198 = por %p196, %p197
      %p199 = scmp.ne.s32.totalorder %s191, %s193
      %p200 = scmp.eq.s32.totalorder %s31, 1
      %p201 = por %p199, %p200
      %p202 = scmp.ne.s32.totalorder %s193, %s194
      %p203 = scmp.eq.s32.totalorder %s31, 0
      %p204 = por %p202, %p203
      %p205 = scmp.ne.s32.totalorder %s193, %s194
      %p206 = scmp.eq.s32.totalorder %s32, 1
      %p207 = por %p205, %p206
      %p209 = scmp.ne.s32.totalorder %s194, %s208
      %p210 = scmp.eq.s32.totalorder %s32, 0
      %p211 = por %p209, %p210
      %s213 = sadd.s32 %s212, 1
      %p216 = scmp.eq.s32.totalorder %s26, 1
      %p217 = scmp.ne.s32.totalorder %s212, %s214
      %p218 = scmp.eq.s32.totalorder %s26, 0
      %p219 = por %p217, %p218
      %p220 = scmp.ne.s32.totalorder %s212, %s214
      %p221 = scmp.eq.s32.totalorder %s31, 1
      %p222 = por %p220, %p221
      %p223 = scmp.ne.s32.totalorder %s214, %s215
      %p224 = scmp.eq.s32.totalorder %s31, 0
      %p225 = por %p223, %p224
      %p226 = scmp.ne.s32.totalorder %s214, %s215
      %p227 = scmp.eq.s32.totalorder %s32, 1
      %p228 = por %p226, %p227
      %p230 = scmp.ne.s32.totalorder %s215, %s229
      %p231 = scmp.eq.s32.totalorder %s32, 0
      %p232 = por %p230, %p231
      %s234 = sadd.s32 %s233, 1
      %p237 = scmp.eq.s32.totalorder %s26, 1
      %p238 = scmp.ne.s32.totalorder %s233, %s235
      %p239 = scmp.eq.s32.totalorder %s26, 0
      %p240 = por %p238, %p239
      %p241 = scmp.ne.s32.totalorder %s233, %s235
      %p242 = scmp.eq.s32.totalorder %s31, 1
      %p243 = por %p241, %p242
      %p244 = scmp.ne.s32.totalorder %s235, %s236
      %p245 = scmp.eq.s32.totalorder %s31, 0
      %p246 = por %p244, %p245
      %p247 = scmp.ne.s32.totalorder %s235, %s236
      %p248 = scmp.eq.s32.totalorder %s32, 1
      %p249 = por %p247, %p248
      %p251 = scmp.ne.s32.totalorder %s236, %s250
      %p252 = scmp.eq.s32.totalorder %s32, 0
      %p253 = por %p251, %p252
      %s255 = sadd.s32 %s254, 1
      %p258 = scmp.eq.s32.totalorder %s26, 1
      %p259 = scmp.ne.s32.totalorder %s254, %s256
      %p260 = scmp.eq.s32.totalorder %s26, 0
      %p261 = por %p259, %p260
      %p262 = scmp.ne.s32.totalorder %s254, %s256
      %p263 = scmp.eq.s32.totalorder %s31, 1
      %p264 = por %p262, %p263
      %p265 = scmp.ne.s32.totalorder %s256, %s257
      %p266 = scmp.eq.s32.totalorder %s31, 0
      %p267 = por %p265, %p266
      %p268 = scmp.ne.s32.totalorder %s256, %s257
      %p269 = scmp.eq.s32.totalorder %s32, 1
      %p270 = por %p268, %p269
      %p272 = scmp.ne.s32.totalorder %s257, %s271
      %p273 = scmp.eq.s32.totalorder %s32, 0
      %p274 = por %p272, %p273
      %s276 = sadd.s32 %s275, 1
      %p279 = scmp.eq.s32.totalorder %s26, 1
      %p280 = scmp.ne.s32.totalorder %s275, %s277
      %p281 = scmp.eq.s32.totalorder %s26, 0
      %p282 = por %p280, %p281
      %p283 = scmp.ne.s32.totalorder %s275, %s277
      %p284 = scmp.eq.s32.totalorder %s31, 1
      %p285 = por %p283, %p284
      %p286 = scmp.ne.s32.totalorder %s277, %s278
      %p287 = scmp.eq.s32.totalorder %s31, 0
      %p288 = por %p286, %p287
      %p289 = scmp.ne.s32.totalorder %s277, %s278
      %p290 = scmp.eq.s32.totalorder %s32, 1
      %p291 = por %p289, %p290
      %p293 = scmp.ne.s32.totalorder %s278, %s292
      %p294 = scmp.eq.s32.totalorder %s32, 0
      %p295 = por %p293, %p294
      %s296 = ssub.s32 %s26, %s33
      %p297 = scmp.eq.s32.totalorder %s296, 0
      %s299 = sadd.s32 %s298, 1
      %s300 = scalar_select %p297, %s298, %s299
      %p303 = pneg %p297
      %p304 = scmp.eq.s32.totalorder %s26, 1
      %p305 = por %p303, %p304
      %p306 = scmp.ne.s32.totalorder %s298, %s301
      %p307 = scmp.eq.s32.totalorder %s26, 0
      %p308 = por %p306, %p307
      %p309 = scmp.ne.s32.totalorder %s298, %s301
      %p310 = scmp.eq.s32.totalorder %s31, 1
      %p311 = por %p309, %p310
      %p312 = scmp.ne.s32.totalorder %s301, %s302
      %p313 = scmp.eq.s32.totalorder %s31, 0
      %p314 = por %p312, %p313
      %p315 = scmp.ne.s32.totalorder %s301, %s302
      %p316 = scmp.eq.s32.totalorder %s32, 1
      %p317 = por %p315, %p316
      %p319 = scmp.ne.s32.totalorder %s302, %s318
      %p320 = scmp.eq.s32.totalorder %s32, 0
      %p321 = por %p319, %p320
      %p322 = scmp.le.s32.totalorder 1, %s26
      %p323 = scmp.lt.s32.totalorder %s26, 3
      %p324 = pnand %p322, %p323
      %p325 = pneg %p324
      // Predicated region
      $region9: #{tpu_custom_call.1} parent=5 // pred_check
        _
      $region10: #{tpu_custom_call.1} parent=5 // pred_check_branch
        %327 = sbr.rel (%p324) target = $region12
      $region11: #{tpu_custom_call.1} parent=5 // pred_region
        %s328 = ssub.s32 %s26, 1
        // Predicated region
        $region13: #{tpu_custom_call.1} parent=11 // pred_check
          %p329 = pneg %p99
        $region14: #{tpu_custom_call.1} parent=11 // pred_check_branch
          %331 = sbr.rel (%p329) target = $region16
        $region15: #{tpu_custom_call.1} parent=11 // pred_region
          _
        $region16: #{tpu_custom_call.1} parent=11 // pred_fallthru
          _
        // Predicated region
        $region17: #{tpu_custom_call.1} parent=11 // pred_check
          %p332 = pneg %p120
        $region18: #{tpu_custom_call.1} parent=11 // pred_check_branch
          %334 = sbr.rel (%p332) target = $region20
        $region19: #{tpu_custom_call.1} parent=11 // pred_region
          %336 = vsyncadd [#allocation3], 0
          %s337 = sshll.u32 %s3, 4
          %s338 = int_to_ptr.hbm [resolvable:$true] %s337
          %s339 = sshll.u32 [#allocation2], 4
          %s340 = int_to_ptr.vmem [resolvable:$true] %s339
          %345 = dma.hbm_to_vmem [thread:$0]  %s338, 2048, %s340, [#allocation3], 128, 128, 8
        $region20: #{tpu_custom_call.1} parent=11 // pred_fallthru
          _
        // Predicated region
        $region21: #{tpu_custom_call.1} parent=11 // pred_check
          %p346 = pneg %p141
        $region22: #{tpu_custom_call.1} parent=11 // pred_check_branch
          %348 = sbr.rel (%p346) target = $region24
        $region23: #{tpu_custom_call.1} parent=11 // pred_region
          %350 = vsyncadd [#allocation6], 0
          %s351 = sshll.u32 %s4, 4
          %s352 = int_to_ptr.hbm [resolvable:$true] %s351
          %s353 = sshll.u32 [#allocation5], 4
          %s354 = int_to_ptr.vmem [resolvable:$true] %s353
          %359 = dma.hbm_to_vmem [thread:$0]  %s352, 1024, %s354, [#allocation6], 64, 64, 4
        $region24: #{tpu_custom_call.1} parent=11 // pred_fallthru
          _
        // Predicated region
        $region25: #{tpu_custom_call.1} parent=11 // pred_check
          %p360 = pneg %p162
        $region26: #{tpu_custom_call.1} parent=11 // pred_check_branch
          %362 = sbr.rel (%p360) target = $region28
        $region27: #{tpu_custom_call.1} parent=11 // pred_region
          %364 = vsyncadd [#allocation6], 0
          %s365 = sshll.u32 %s5, 4
          %s366 = int_to_ptr.hbm [resolvable:$true] %s365
          %s367 = sshll.u32 [#allocation7], 4
          %s368 = int_to_ptr.vmem [resolvable:$true] %s367
          %373 = dma.hbm_to_vmem [thread:$0]  %s366, 1024, %s368, [#allocation6], 64, 64, 4
        $region28: #{tpu_custom_call.1} parent=11 // pred_fallthru
          _
        // Predicated region
        $region29: #{tpu_custom_call.1} parent=11 // pred_check
          %p374 = pneg %p183
        $region30: #{tpu_custom_call.1} parent=11 // pred_check_branch
          %376 = sbr.rel (%p374) target = $region32
        $region31: #{tpu_custom_call.1} parent=11 // pred_region
          %378 = vsyncadd [#allocation9], 0
          %s379 = sshll.u32 %s6, 4
          %s380 = int_to_ptr.hbm [resolvable:$true] %s379
          %s381 = sshll.u32 [#allocation8], 4
          %s382 = int_to_ptr.vmem [resolvable:$true] %s381
          %387 = dma.hbm_to_vmem [thread:$0]  %s380, 1024, %s382, [#allocation9], 64, 64, 4
        $region32: #{tpu_custom_call.1} parent=11 // pred_fallthru
          _
        // Predicated region
        $region33: #{tpu_custom_call.1} parent=11 // pred_check
          %p388 = pneg %p204
        $region34: #{tpu_custom_call.1} parent=11 // pred_check_branch
          %390 = sbr.rel (%p388) target = $region36
        $region35: #{tpu_custom_call.1} parent=11 // pred_region
          %392 = vsyncadd [#allocation9], 0
          %s393 = sshll.u32 %s7, 4
          %s394 = int_to_ptr.hbm [resolvable:$true] %s393
          %s395 = sshll.u32 [#allocation10], 4
          %s396 = int_to_ptr.vmem [resolvable:$true] %s395
          %401 = dma.hbm_to_vmem [thread:$0]  %s394, 1024, %s396, [#allocation9], 64, 64, 4
        $region36: #{tpu_custom_call.1} parent=11 // pred_fallthru
          _
        // Predicated region
        $region37: #{tpu_custom_call.1} parent=11 // pred_check
          %p402 = pneg %p225
        $region38: #{tpu_custom_call.1} parent=11 // pred_check_branch
          %404 = sbr.rel (%p402) target = $region40
        $region39: #{tpu_custom_call.1} parent=11 // pred_region
          %406 = vsyncadd [#allocation12], 0
          %s407 = sshll.u32 %s8, 4
          %s408 = int_to_ptr.hbm [resolvable:$true] %s407
          %s409 = sshll.u32 [#allocation11], 4
          %s410 = int_to_ptr.vmem [resolvable:$true] %s409
          %415 = dma.hbm_to_vmem [thread:$0]  %s408, 1024, %s410, [#allocation12], 64, 64, 4
        $region40: #{tpu_custom_call.1} parent=11 // pred_fallthru
          _
        // Predicated region
        $region41: #{tpu_custom_call.1} parent=11 // pred_check
          %p416 = pneg %p246
        $region42: #{tpu_custom_call.1} parent=11 // pred_check_branch
          %418 = sbr.rel (%p416) target = $region44
        $region43: #{tpu_custom_call.1} parent=11 // pred_region
          %420 = vsyncadd [#allocation12], 0
          %s421 = sshll.u32 %s9, 4
          %s422 = int_to_ptr.hbm [resolvable:$true] %s421
          %s423 = sshll.u32 [#allocation13], 4
          %s424 = int_to_ptr.vmem [resolvable:$true] %s423
          %429 = dma.hbm_to_vmem [thread:$0]  %s422, 3072, %s424, [#allocation12], 64, 64, 4
        $region44: #{tpu_custom_call.1} parent=11 // pred_fallthru
          _
        // Predicated region
        $region45: #{tpu_custom_call.1} parent=11 // pred_check
          %p430 = pneg %p267
        $region46: #{tpu_custom_call.1} parent=11 // pred_check_branch
          %432 = sbr.rel (%p430) target = $region48
        $region47: #{tpu_custom_call.1} parent=11 // pred_region
          %434 = vsyncadd [#allocation15], 0
          %s435 = sshll.u32 %s10, 4
          %s436 = int_to_ptr.hbm [resolvable:$true] %s435
          %s437 = sshll.u32 [#allocation14], 4
          %s438 = int_to_ptr.vmem [resolvable:$true] %s437
          %443 = dma.hbm_to_vmem [thread:$0]  %s436, 1024, %s438, [#allocation15], 64, 64, 4
        $region48: #{tpu_custom_call.1} parent=11 // pred_fallthru
          _
        // Predicated region
        $region49: #{tpu_custom_call.1} parent=11 // pred_check
          %p444 = pneg %p288
        $region50: #{tpu_custom_call.1} parent=11 // pred_check_branch
          %446 = sbr.rel (%p444) target = $region52
        $region51: #{tpu_custom_call.1} parent=11 // pred_region
          _
        $region52: #{tpu_custom_call.1} parent=11 // pred_fallthru
          _
      $region12: #{tpu_custom_call.1} parent=5 // pred_fallthru
        _
      %p447 = scmp.lt.s32.totalorder %s26, 2
      // Predicated region
      $region53: #{tpu_custom_call.1} parent=5 // pred_check
        %p448 = pneg %p447
      $region54: #{tpu_custom_call.1} parent=5 // pred_check_branch
        %450 = sbr.rel (%p448) target = $region56
      $region55: #{tpu_custom_call.1} parent=5 // pred_region
        // Predicated region
        $region57: #{tpu_custom_call.1} parent=55 // pred_check
          %p451 = pneg %p46
        $region58: #{tpu_custom_call.1} parent=55 // pred_check_branch
          %453 = sbr.rel (%p451) target = $region60
        $region59: #{tpu_custom_call.1} parent=55 // pred_region
          %s454 = smul.u32 20, %s26
          %p455 = scmp.lt.s32.totalorder %s454, 39
          %s456 = scalar_select %p455, %s454, 39
          %s457 = smul.addr %s456, 4
          %s458 = scalar_lea.vmem %s0, %s457
          %s459 = smul.u32 20, %s26
        $region60: #{tpu_custom_call.1} parent=55 // pred_fallthru
          _
        // Predicated region
        $region61: #{tpu_custom_call.1} parent=55 // pred_check
          %p460 = pneg %p72
        $region62: #{tpu_custom_call.1} parent=55 // pred_check_branch
          %462 = sbr.rel (%p460) target = $region64
        $region63: #{tpu_custom_call.1} parent=55 // pred_region
          %s463 = smul.u32 20, %s26
          %p464 = scmp.lt.s32.totalorder %s463, 39
          %s465 = scalar_select %p464, %s463, 39
          %s466 = smul.addr %s465, 4
          %s467 = scalar_lea.vmem %s1, %s466
          %s468 = smul.u32 20, %s26
        $region64: #{tpu_custom_call.1} parent=55 // pred_fallthru
          _
      $region56: #{tpu_custom_call.1} parent=5 // pred_fallthru
        _
      %p469 = scmp.le.s32.totalorder 1, %s26
      %p470 = scmp.lt.s32.totalorder %s26, 3
      %p471 = pnand %p469, %p470
      %p472 = pneg %p471
      // Predicated region
      $region65: #{tpu_custom_call.1} parent=5 // pred_check
        _
      $region66: #{tpu_custom_call.1} parent=5 // pred_check_branch
        %474 = sbr.rel (%p471) target = $region68
      $region67: #{tpu_custom_call.1} parent=5 // pred_region
        %s475 = ssub.s32 %s26, 1
        // Predicated region
        $region69: #{tpu_custom_call.1} parent=67 // pred_check
          %p476 = pneg %p120
        $region70: #{tpu_custom_call.1} parent=67 // pred_check_branch
          %478 = sbr.rel (%p476) target = $region72
        $region71: #{tpu_custom_call.1} parent=67 // pred_region
          %480 = dma.done [#allocation3], 2048
        $region72: #{tpu_custom_call.1} parent=67 // pred_fallthru
          _
        // Predicated region
        $region73: #{tpu_custom_call.1} parent=67 // pred_check
          %p481 = pneg %p141
        $region74: #{tpu_custom_call.1} parent=67 // pred_check_branch
          %483 = sbr.rel (%p481) target = $region76
        $region75: #{tpu_custom_call.1} parent=67 // pred_region
          %485 = dma.done [#allocation6], 1024
        $region76: #{tpu_custom_call.1} parent=67 // pred_fallthru
          _
        // Predicated region
        $region77: #{tpu_custom_call.1} parent=67 // pred_check
          %p486 = pneg %p162
        $region78: #{tpu_custom_call.1} parent=67 // pred_check_branch
          %488 = sbr.rel (%p486) target = $region80
        $region79: #{tpu_custom_call.1} parent=67 // pred_region
          %490 = dma.done [#allocation6], 1024
        $region80: #{tpu_custom_call.1} parent=67 // pred_fallthru
          _
        // Predicated region
        $region81: #{tpu_custom_call.1} parent=67 // pred_check
          %p491 = pneg %p183
        $region82: #{tpu_custom_call.1} parent=67 // pred_check_branch
          %493 = sbr.rel (%p491) target = $region84
        $region83: #{tpu_custom_call.1} parent=67 // pred_region
          %495 = dma.done [#allocation9], 1024
        $region84: #{tpu_custom_call.1} parent=67 // pred_fallthru
          _
        // Predicated region
        $region85: #{tpu_custom_call.1} parent=67 // pred_check
          %p496 = pneg %p204
        $region86: #{tpu_custom_call.1} parent=67 // pred_check_branch
          %498 = sbr.rel (%p496) target = $region88
        $region87: #{tpu_custom_call.1} parent=67 // pred_region
          %500 = dma.done [#allocation9], 1024
        $region88: #{tpu_custom_call.1} parent=67 // pred_fallthru
          _
        // Predicated region
        $region89: #{tpu_custom_call.1} parent=67 // pred_check
          %p501 = pneg %p225
        $region90: #{tpu_custom_call.1} parent=67 // pred_check_branch
          %503 = sbr.rel (%p501) target = $region92
        $region91: #{tpu_custom_call.1} parent=67 // pred_region
          %505 = dma.done [#allocation12], 1024
        $region92: #{tpu_custom_call.1} parent=67 // pred_fallthru
          _
        // Predicated region
        $region93: #{tpu_custom_call.1} parent=67 // pred_check
          %p506 = pneg %p246
        $region94: #{tpu_custom_call.1} parent=67 // pred_check_branch
          %508 = sbr.rel (%p506) target = $region96
        $region95: #{tpu_custom_call.1} parent=67 // pred_region
          %510 = dma.done [#allocation12], 3072
        $region96: #{tpu_custom_call.1} parent=67 // pred_fallthru
          _
        // Predicated region
        $region97: #{tpu_custom_call.1} parent=67 // pred_check
          %p511 = pneg %p267
        $region98: #{tpu_custom_call.1} parent=67 // pred_check_branch
          %513 = sbr.rel (%p511) target = $region100
        $region99: #{tpu_custom_call.1} parent=67 // pred_region
          %515 = dma.done [#allocation15], 1024
        $region100: #{tpu_custom_call.1} parent=67 // pred_fallthru
          _
        %s516 = smul.u32 20, %s31
        %p517 = scmp.lt.s32.totalorder %s516, 39
        %s518 = scalar_select %p517, %s516, 39
        %s519 = smul.addr %s518, 4
        %s520 = scalar_lea.vmem %s0, %s519
        %p521 = pneg %p52
        %p522 = pneg %p49
        %s523 = smul.u32 20, %s31
        %p524 = scmp.lt.s32.totalorder %s523, 39
        %s525 = scalar_select %p524, %s523, 39
        %s526 = smul.addr %s525, 4
        %s527 = scalar_lea.vmem %s1, %s526
        %p528 = pneg %p78
        %p529 = pneg %p75
        %p530 = pneg %p99
        %p531 = pneg %p96
        %p532 = pneg %p120
        %p533 = pneg %p117
        %p534 = pneg %p141
        %p535 = pneg %p138
        %p536 = pneg %p162
        %p537 = pneg %p159
        %p538 = pneg %p183
        %p539 = pneg %p180
        %p540 = pneg %p204
        %p541 = pneg %p201
        %p542 = pneg %p225
        %p543 = pneg %p222
        %p544 = pneg %p246
        %p545 = pneg %p243
        %p546 = pneg %p267
        %p547 = pneg %p264
        %p548 = pneg %p288
        %p549 = pneg %p285
        %p550 = pneg %p314
        %p551 = pneg %p311
        %s552 = sand.u32 %s301, 1
        %s553 = scalar_lea.sflag [#allocation4], %s552
        %s554 = sand.u32 %s301, 1
        %s555 = smul.addr %s554, 160
        %s556 = scalar_lea.vmem [#allocation16], %s555
        %s557 = smul.u32 20, %s31
        %p558 = scmp.lt.s32.totalorder %s557, 39
        %s559 = scalar_select %p558, %s557, 39
        %s560 = smul.addr %s559, 4
        %s561 = scalar_lea.vmem %s0, %s560
        %s562 = smul.u32 20, %s31
        %s563 = smul.u32 20, %s31
        %p564 = scmp.lt.s32.totalorder %s563, 39
        %s565 = scalar_select %p564, %s563, 39
        %s566 = smul.addr %s565, 4
        %s567 = scalar_lea.vmem %s1, %s566
        %s568 = smul.u32 20, %s31
        %s569 = smul.u32 20, %s31
        %v571 = vld [vmem:[%s561] sm:$0xf]
        %v572 = vld [vmem:[%s561 + $0x4] sm:$0xf]
        %v573 = vld [vmem:[%s561 + $0x8] sm:$0xf]
        %v574 = vld [vmem:[%s561 + $0xc] sm:$0xf]
        %v575 = vld [vmem:[%s561 + $0x10] sm:$0xf]
        %v576 = vld [vmem:[%s561 + $0x14] sm:$0xf]
        %v577 = vld [vmem:[%s561 + $0x18] sm:$0xf]
        %v578 = vld [vmem:[%s561 + $0x1c] sm:$0xf]
        %v579 = vld [vmem:[%s561 + $0x20] sm:$0xf]
        %v580 = vld [vmem:[%s561 + $0x24] sm:$0xf]
        %v581 = vld [vmem:[%s561 + $0x28] sm:$0xf]
        %v582 = vld [vmem:[%s561 + $0x2c] sm:$0xf]
        %v583 = vld [vmem:[%s561 + $0x30] sm:$0xf]
        %v584 = vld [vmem:[%s561 + $0x34] sm:$0xf]
        %v585 = vld [vmem:[%s561 + $0x38] sm:$0xf]
        %v586 = vld [vmem:[%s561 + $0x3c] sm:$0xf]
        %v587 = vld [vmem:[%s561 + $0x40] sm:$0xf]
        %v588 = vld [vmem:[%s561 + $0x44] sm:$0xf]
        %v589 = vld [vmem:[%s561 + $0x48] sm:$0xf]
        %v590 = vld [vmem:[%s561 + $0x4c] sm:$0xf]
        %v591 = vld [vmem:[#allocation2] sm:$0xff]
        %v592 = vld [vmem:[#allocation2 + $0x8] sm:$0xff]
        %v593 = vld [vmem:[#allocation2 + $0x10] sm:$0xff]
        %v594 = vld [vmem:[#allocation2 + $0x18] sm:$0xff]
        %v595 = vld [vmem:[#allocation2 + $0x20] sm:$0xff]
        %v596 = vld [vmem:[#allocation2 + $0x28] sm:$0xff]
        %v597 = vld [vmem:[#allocation2 + $0x30] sm:$0xff]
        %v598 = vld [vmem:[#allocation2 + $0x38] sm:$0xff]
        %v599 = vld [vmem:[#allocation2 + $0x40] sm:$0xff]
        %v600 = vld [vmem:[#allocation2 + $0x48] sm:$0xff]
        %v601 = vld [vmem:[#allocation2 + $0x50] sm:$0xff]
        %v602 = vld [vmem:[#allocation2 + $0x58] sm:$0xff]
        %v603 = vld [vmem:[#allocation2 + $0x60] sm:$0xff]
        %v604 = vld [vmem:[#allocation2 + $0x68] sm:$0xff]
        %v605 = vld [vmem:[#allocation2 + $0x70] sm:$0xff]
        %v606 = vld [vmem:[#allocation2 + $0x78] sm:$0xff]
        %v607 = vld [vmem:[%s11] sm:$0x3]
        %v609 = vperm.slane %v607, 0
        %v610 = vperm.slane %v607, 1
        %v633 = vunpack.c.l.b16 %v571
        %v634 = vunpack.c.l.b16 %v572
        %v635 = vunpack.c.l.b16 %v573
        %v636 = vunpack.c.l.b16 %v574
        %v637 = vunpack.c.l.b16 %v575
        %v638 = vunpack.c.l.b16 %v576
        %v639 = vunpack.c.l.b16 %v577
        %v640 = vunpack.c.l.b16 %v578
        %v641 = vunpack.c.l.b16 %v579
        %v642 = vunpack.c.l.b16 %v580
        %v643 = vunpack.c.l.b16 %v581
        %v644 = vunpack.c.l.b16 %v582
        %v645 = vunpack.c.l.b16 %v583
        %v646 = vunpack.c.l.b16 %v584
        %v647 = vunpack.c.l.b16 %v585
        %v648 = vunpack.c.l.b16 %v586
        %v649 = vunpack.c.l.b16 %v587
        %v650 = vunpack.c.l.b16 %v588
        %v651 = vunpack.c.l.b16 %v589
        %v652 = vunpack.c.l.b16 %v590
        %v653 = vpack.c.b16 %v634, %v633
        %v654 = vpack.c.b16 %v636, %v635
        %v655 = vpack.c.b16 %v638, %v637
        %v656 = vpack.c.b16 %v640, %v639
        %v657 = vpack.c.b16 %v642, %v641
        %v658 = vpack.c.b16 %v644, %v643
        %v659 = vpack.c.b16 %v646, %v645
        %v660 = vpack.c.b16 %v648, %v647
        %v661 = vpack.c.b16 %v650, %v649
        %v662 = vpack.c.b16 %v652, %v651
        %v689 = vunpack.c.l.b16 %v591
        %v690 = vunpack.c.h.b16 %v591
        %v691 = vunpack.c.l.b16 %v592
        %v692 = vunpack.c.h.b16 %v592
        %v693 = vunpack.c.l.b16 %v593
        %v694 = vunpack.c.h.b16 %v593
        %v695 = vunpack.c.l.b16 %v594
        %v696 = vunpack.c.h.b16 %v594
        %v697 = vunpack.c.l.b16 %v595
        %v698 = vunpack.c.h.b16 %v595
        %v699 = vunpack.c.l.b16 %v596
        %v700 = vunpack.c.h.b16 %v596
        %v701 = vunpack.c.l.b16 %v597
        %v702 = vunpack.c.h.b16 %v597
        %v703 = vunpack.c.l.b16 %v598
        %v704 = vunpack.c.h.b16 %v598
        %v705 = vunpack.c.l.b16 %v599
        %v706 = vunpack.c.h.b16 %v599
        %v707 = vunpack.c.l.b16 %v600
        %v708 = vunpack.c.h.b16 %v600
        %v709 = vunpack.c.l.b16 %v601
        %v710 = vunpack.c.h.b16 %v601
        %v711 = vunpack.c.l.b16 %v602
        %v712 = vunpack.c.h.b16 %v602
        %v713 = vunpack.c.l.b16 %v603
        %v714 = vunpack.c.h.b16 %v603
        %v715 = vunpack.c.l.b16 %v604
        %v716 = vunpack.c.h.b16 %v604
        %v717 = vunpack.c.l.b16 %v605
        %v718 = vunpack.c.h.b16 %v605
        %v719 = vunpack.c.l.b16 %v606
        %v720 = vunpack.c.h.b16 %v606
        %v721 = vpack.c.b16 %v691, %v689
        %v722 = vpack.c.b16 %v692, %v690
        %v723 = vpack.c.b16 %v695, %v693
        %v724 = vpack.c.b16 %v696, %v694
        %v725 = vpack.c.b16 %v699, %v697
        %v726 = vpack.c.b16 %v700, %v698
        %v727 = vpack.c.b16 %v703, %v701
        %v728 = vpack.c.b16 %v704, %v702
        %v729 = vpack.c.b16 %v707, %v705
        %v730 = vpack.c.b16 %v708, %v706
        %v731 = vpack.c.b16 %v711, %v709
        %v732 = vpack.c.b16 %v712, %v710
        %v733 = vpack.c.b16 %v715, %v713
        %v734 = vpack.c.b16 %v716, %v714
        %v735 = vpack.c.b16 %v719, %v717
        %v736 = vpack.c.b16 %v720, %v718
        %753 = vmatpush.bf16.msra.mxu0 %v735
        %754 = vmatpush.bf16.msra.mxu0 %v733
        %755 = vmatpush.bf16.msra.mxu0 %v731
        %756 = vmatpush.bf16.msra.mxu0 %v729
        %757 = vmatpush.bf16.msra.mxu0 %v727
        %758 = vmatpush.bf16.msra.mxu0 %v725
        %759 = vmatpush.bf16.msra.mxu0 %v723
        %760 = vmatpush.bf16.msra.mxu0 %v721
        %761 = vmatmul.bf16.gmra.mxu0 %v653
        %v762 = vpop.f32.mrf.mxu0
        %v763 = vadd.f32 %v609, %v762
        %v764 = vpop.f32.mrf.mxu0
        %v765 = vadd.f32 %v609, %v764
        %766 = vmatmul.bf16.gmra.mxu0 %v654
        %v767 = vpop.f32.mrf.mxu0
        %v768 = vadd.f32 %v609, %v767
        %v769 = vpop.f32.mrf.mxu0
        %v770 = vadd.f32 %v609, %v769
        %771 = vmatmul.bf16.gmra.mxu0 %v655
        %v772 = vpop.f32.mrf.mxu0
        %v773 = vadd.f32 %v609, %v772
        %v774 = vpop.f32.mrf.mxu0
        %v775 = vadd.f32 %v609, %v774
        %776 = vmatmul.bf16.gmra.mxu0 %v656
        %v777 = vpop.f32.mrf.mxu0
        %v778 = vadd.f32 %v609, %v777
        %v779 = vpop.f32.mrf.mxu0
        %v780 = vadd.f32 %v609, %v779
        %781 = vmatmul.bf16.gmra.mxu0 %v657
        %v782 = vpop.f32.mrf.mxu0
        %v783 = vadd.f32 %v609, %v782
        %v784 = vpop.f32.mrf.mxu0
        %v785 = vadd.f32 %v609, %v784
        %786 = vmatmul.bf16.gmra.mxu0 %v658
        %v787 = vpop.f32.mrf.mxu0
        %v788 = vadd.f32 %v609, %v787
        %v789 = vpop.f32.mrf.mxu0
        %v790 = vadd.f32 %v609, %v789
        %791 = vmatmul.bf16.gmra.mxu0 %v659
        %v792 = vpop.f32.mrf.mxu0
        %v793 = vadd.f32 %v609, %v792
        %v794 = vpop.f32.mrf.mxu0
        %v795 = vadd.f32 %v609, %v794
        %796 = vmatmul.bf16.gmra.mxu0 %v660
        %v797 = vpop.f32.mrf.mxu0
        %v798 = vadd.f32 %v609, %v797
        %v799 = vpop.f32.mrf.mxu0
        %v800 = vadd.f32 %v609, %v799
        %801 = vmatmul.bf16.gmra.mxu0 %v661
        %v802 = vpop.f32.mrf.mxu0
        %v803 = vadd.f32 %v609, %v802
        %v804 = vpop.f32.mrf.mxu0
        %v805 = vadd.f32 %v609, %v804
        %806 = vmatmul.bf16.gmra.mxu0 %v662
        %v807 = vpop.f32.mrf.mxu0
        %v808 = vadd.f32 %v609, %v807
        %v809 = vpop.f32.mrf.mxu0
        %v810 = vadd.f32 %v609, %v809
        %811 = vdwg.mxu0
        %812 = vmatpush.bf16.msra.mxu0 %v736
        %813 = vmatpush.bf16.msra.mxu0 %v734
        %814 = vmatpush.bf16.msra.mxu0 %v732
        %815 = vmatpush.bf16.msra.mxu0 %v730
        %816 = vmatpush.bf16.msra.mxu0 %v728
        %817 = vmatpush.bf16.msra.mxu0 %v726
        %818 = vmatpush.bf16.msra.mxu0 %v724
        %819 = vmatpush.bf16.msra.mxu0 %v722
        %820 = vmatmul.bf16.gmra.mxu0 %v653
        %v821 = vpop.f32.mrf.mxu0
        %v822 = vadd.f32 %v610, %v821
        %v823 = vpop.f32.mrf.mxu0
        %v824 = vadd.f32 %v610, %v823
        %825 = vmatmul.bf16.gmra.mxu0 %v654
        %v826 = vpop.f32.mrf.mxu0
        %v827 = vadd.f32 %v610, %v826
        %v828 = vpop.f32.mrf.mxu0
        %v829 = vadd.f32 %v610, %v828
        %830 = vmatmul.bf16.gmra.mxu0 %v655
        %v831 = vpop.f32.mrf.mxu0
        %v832 = vadd.f32 %v610, %v831
        %v833 = vpop.f32.mrf.mxu0
        %v834 = vadd.f32 %v610, %v833
        %835 = vmatmul.bf16.gmra.mxu0 %v656
        %v836 = vpop.f32.mrf.mxu0
        %v837 = vadd.f32 %v610, %v836
        %v838 = vpop.f32.mrf.mxu0
        %v839 = vadd.f32 %v610, %v838
        %840 = vmatmul.bf16.gmra.mxu0 %v657
        %v841 = vpop.f32.mrf.mxu0
        %v842 = vadd.f32 %v610, %v841
        %v843 = vpop.f32.mrf.mxu0
        %v844 = vadd.f32 %v610, %v843
        %845 = vmatmul.bf16.gmra.mxu0 %v658
        %v846 = vpop.f32.mrf.mxu0
        %v847 = vadd.f32 %v610, %v846
        %v848 = vpop.f32.mrf.mxu0
        %v849 = vadd.f32 %v610, %v848
        %850 = vmatmul.bf16.gmra.mxu0 %v659
        %v851 = vpop.f32.mrf.mxu0
        %v852 = vadd.f32 %v610, %v851
        %v853 = vpop.f32.mrf.mxu0
        %v854 = vadd.f32 %v610, %v853
        %855 = vmatmul.bf16.gmra.mxu0 %v660
        %v856 = vpop.f32.mrf.mxu0
        %v857 = vadd.f32 %v610, %v856
        %v858 = vpop.f32.mrf.mxu0
        %v859 = vadd.f32 %v610, %v858
        %860 = vmatmul.bf16.gmra.mxu0 %v661
        %v861 = vpop.f32.mrf.mxu0
        %v862 = vadd.f32 %v610, %v861
        %v863 = vpop.f32.mrf.mxu0
        %v864 = vadd.f32 %v610, %v863
        %865 = vmatmul.bf16.gmra.mxu0 %v662
        %v866 = vpop.f32.mrf.mxu0
        %v867 = vadd.f32 %v610, %v866
        %v868 = vpop.f32.mrf.mxu0
        %v869 = vadd.f32 %v610, %v868
        %870 = vdwg.mxu0
        %v871 = vmul.f32 %v763, 0.2
        %v872 = vmul.f32 %v822, 0.2
        %v873 = vmul.f32 %v765, 0.2
        %v874 = vmul.f32 %v824, 0.2
        %v875 = vmul.f32 %v768, 0.2
        %v876 = vmul.f32 %v827, 0.2
        %v877 = vmul.f32 %v770, 0.2
        %v878 = vmul.f32 %v829, 0.2
        %v879 = vmul.f32 %v773, 0.2
        %v880 = vmul.f32 %v832, 0.2
        %v881 = vmul.f32 %v775, 0.2
        %v882 = vmul.f32 %v834, 0.2
        %v883 = vmul.f32 %v778, 0.2
        %v884 = vmul.f32 %v837, 0.2
        %v885 = vmul.f32 %v780, 0.2
        %v886 = vmul.f32 %v839, 0.2
        %v887 = vmul.f32 %v783, 0.2
        %v888 = vmul.f32 %v842, 0.2
        %v889 = vmul.f32 %v785, 0.2
        %v890 = vmul.f32 %v844, 0.2
        %v891 = vmul.f32 %v788, 0.2
        %v892 = vmul.f32 %v847, 0.2
        %v893 = vmul.f32 %v790, 0.2
        %v894 = vmul.f32 %v849, 0.2
        %v895 = vmul.f32 %v793, 0.2
        %v896 = vmul.f32 %v852, 0.2
        %v897 = vmul.f32 %v795, 0.2
        %v898 = vmul.f32 %v854, 0.2
        %v899 = vmul.f32 %v798, 0.2
        %v900 = vmul.f32 %v857, 0.2
        %v901 = vmul.f32 %v800, 0.2
        %v902 = vmul.f32 %v859, 0.2
        %v903 = vmul.f32 %v803, 0.2
        %v904 = vmul.f32 %v862, 0.2
        %v905 = vmul.f32 %v805, 0.2
        %v906 = vmul.f32 %v864, 0.2
        %v907 = vmul.f32 %v808, 0.2
        %v908 = vmul.f32 %v867, 0.2
        %v909 = vmul.f32 %v810, 0.2
        %v910 = vmul.f32 %v869, 0.2
        %v911 = vmax.f32 %v763, %v871
        %v912 = vmax.f32 %v822, %v872
        %v913 = vmax.f32 %v765, %v873
        %v914 = vmax.f32 %v824, %v874
        %v915 = vmax.f32 %v768, %v875
        %v916 = vmax.f32 %v827, %v876
        %v917 = vmax.f32 %v770, %v877
        %v918 = vmax.f32 %v829, %v878
        %v919 = vmax.f32 %v773, %v879
        %v920 = vmax.f32 %v832, %v880
        %v921 = vmax.f32 %v775, %v881
        %v922 = vmax.f32 %v834, %v882
        %v923 = vmax.f32 %v778, %v883
        %v924 = vmax.f32 %v837, %v884
        %v925 = vmax.f32 %v780, %v885
        %v926 = vmax.f32 %v839, %v886
        %v927 = vmax.f32 %v783, %v887
        %v928 = vmax.f32 %v842, %v888
        %v929 = vmax.f32 %v785, %v889
        %v930 = vmax.f32 %v844, %v890
        %v931 = vmax.f32 %v788, %v891
        %v932 = vmax.f32 %v847, %v892
        %v933 = vmax.f32 %v790, %v893
        %v934 = vmax.f32 %v849, %v894
        %v935 = vmax.f32 %v793, %v895
        %v936 = vmax.f32 %v852, %v896
        %v937 = vmax.f32 %v795, %v897
        %v938 = vmax.f32 %v854, %v898
        %v939 = vmax.f32 %v798, %v899
        %v940 = vmax.f32 %v857, %v900
        %v941 = vmax.f32 %v800, %v901
        %v942 = vmax.f32 %v859, %v902
        %v943 = vmax.f32 %v803, %v903
        %v944 = vmax.f32 %v862, %v904
        %v945 = vmax.f32 %v805, %v905
        %v946 = vmax.f32 %v864, %v906
        %v947 = vmax.f32 %v808, %v907
        %v948 = vmax.f32 %v867, %v908
        %v949 = vmax.f32 %v810, %v909
        %v950 = vmax.f32 %v869, %v910
        %v951 = vpack.c.bf16 %v912, %v911
        %v952 = vpack.c.bf16 %v914, %v913
        %v953 = vpack.c.bf16 %v916, %v915
        %v954 = vpack.c.bf16 %v918, %v917
        %v955 = vpack.c.bf16 %v920, %v919
        %v956 = vpack.c.bf16 %v922, %v921
        %v957 = vpack.c.bf16 %v924, %v923
        %v958 = vpack.c.bf16 %v926, %v925
        %v959 = vpack.c.bf16 %v928, %v927
        %v960 = vpack.c.bf16 %v930, %v929
        %v961 = vpack.c.bf16 %v932, %v931
        %v962 = vpack.c.bf16 %v934, %v933
        %v963 = vpack.c.bf16 %v936, %v935
        %v964 = vpack.c.bf16 %v938, %v937
        %v965 = vpack.c.bf16 %v940, %v939
        %v966 = vpack.c.bf16 %v942, %v941
        %v967 = vpack.c.bf16 %v944, %v943
        %v968 = vpack.c.bf16 %v946, %v945
        %v969 = vpack.c.bf16 %v948, %v947
        %v970 = vpack.c.bf16 %v950, %v949
        %v971 = vld [vmem:[#allocation5] sm:$0xf]
        %v972 = vld [vmem:[#allocation5 + $0x4] sm:$0xf]
        %v973 = vld [vmem:[#allocation5 + $0x8] sm:$0xf]
        %v974 = vld [vmem:[#allocation5 + $0xc] sm:$0xf]
        %v975 = vld [vmem:[#allocation5 + $0x10] sm:$0xf]
        %v976 = vld [vmem:[#allocation5 + $0x14] sm:$0xf]
        %v977 = vld [vmem:[#allocation5 + $0x18] sm:$0xf]
        %v978 = vld [vmem:[#allocation5 + $0x1c] sm:$0xf]
        %v979 = vld [vmem:[#allocation5 + $0x20] sm:$0xf]
        %v980 = vld [vmem:[#allocation5 + $0x24] sm:$0xf]
        %v981 = vld [vmem:[#allocation5 + $0x28] sm:$0xf]
        %v982 = vld [vmem:[#allocation5 + $0x2c] sm:$0xf]
        %v983 = vld [vmem:[#allocation5 + $0x30] sm:$0xf]
        %v984 = vld [vmem:[#allocation5 + $0x34] sm:$0xf]
        %v985 = vld [vmem:[#allocation5 + $0x38] sm:$0xf]
        %v986 = vld [vmem:[#allocation5 + $0x3c] sm:$0xf]
        %v987 = vld [vmem:[%s11 + $0x2] sm:$0x1]
        %v989 = vperm.slane %v987, 0
        %v1011 = vunpack.c.l.b16 %v951
        %v1012 = vunpack.c.l.b16 %v952
        %v1013 = vunpack.c.l.b16 %v953
        %v1014 = vunpack.c.l.b16 %v954
        %v1015 = vunpack.c.l.b16 %v955
        %v1016 = vunpack.c.l.b16 %v956
        %v1017 = vunpack.c.l.b16 %v957
        %v1018 = vunpack.c.l.b16 %v958
        %v1019 = vunpack.c.l.b16 %v959
        %v1020 = vunpack.c.l.b16 %v960
        %v1021 = vunpack.c.l.b16 %v961
        %v1022 = vunpack.c.l.b16 %v962
        %v1023 = vunpack.c.l.b16 %v963
        %v1024 = vunpack.c.l.b16 %v964
        %v1025 = vunpack.c.l.b16 %v965
        %v1026 = vunpack.c.l.b16 %v966
        %v1027 = vunpack.c.l.b16 %v967
        %v1028 = vunpack.c.l.b16 %v968
        %v1029 = vunpack.c.l.b16 %v969
        %v1030 = vunpack.c.l.b16 %v970
        %v1031 = vpack.c.b16 %v1012, %v1011
        %v1032 = vpack.c.b16 %v1014, %v1013
        %v1033 = vpack.c.b16 %v1016, %v1015
        %v1034 = vpack.c.b16 %v1018, %v1017
        %v1035 = vpack.c.b16 %v1020, %v1019
        %v1036 = vpack.c.b16 %v1022, %v1021
        %v1037 = vpack.c.b16 %v1024, %v1023
        %v1038 = vpack.c.b16 %v1026, %v1025
        %v1039 = vpack.c.b16 %v1028, %v1027
        %v1040 = vpack.c.b16 %v1030, %v1029
        %v1067 = vunpack.c.l.b16 %v971
        %v1068 = vunpack.c.l.b16 %v972
        %v1069 = vunpack.c.l.b16 %v973
        %v1070 = vunpack.c.l.b16 %v974
        %v1071 = vunpack.c.l.b16 %v975
        %v1072 = vunpack.c.l.b16 %v976
        %v1073 = vunpack.c.l.b16 %v977
        %v1074 = vunpack.c.l.b16 %v978
        %v1075 = vunpack.c.l.b16 %v979
        %v1076 = vunpack.c.l.b16 %v980
        %v1077 = vunpack.c.l.b16 %v981
        %v1078 = vunpack.c.l.b16 %v982
        %v1079 = vunpack.c.l.b16 %v983
        %v1080 = vunpack.c.l.b16 %v984
        %v1081 = vunpack.c.l.b16 %v985
        %v1082 = vunpack.c.l.b16 %v986
        %v1083 = vpack.c.b16 %v1068, %v1067
        %v1084 = vpack.c.b16 %v1070, %v1069
        %v1085 = vpack.c.b16 %v1072, %v1071
        %v1086 = vpack.c.b16 %v1074, %v1073
        %v1087 = vpack.c.b16 %v1076, %v1075
        %v1088 = vpack.c.b16 %v1078, %v1077
        %v1089 = vpack.c.b16 %v1080, %v1079
        %v1090 = vpack.c.b16 %v1082, %v1081
        %1099 = vmatpush.bf16.msra.mxu0 %v1090
        %1100 = vmatpush.bf16.msra.mxu0 %v1089
        %1101 = vmatpush.bf16.msra.mxu0 %v1088
        %1102 = vmatpush.bf16.msra.mxu0 %v1087
        %1103 = vmatpush.bf16.msra.mxu0 %v1086
        %1104 = vmatpush.bf16.msra.mxu0 %v1085
        %1105 = vmatpush.bf16.msra.mxu0 %v1084
        %1106 = vmatpush.bf16.msra.mxu0 %v1083
        %1107 = vmatmul.bf16.gmra.mxu0 %v1031
        %v1108 = vpop.f32.mrf.mxu0
        %v1109 = vadd.f32 %v989, %v1108
        %v1110 = vpop.f32.mrf.mxu0
        %v1111 = vadd.f32 %v989, %v1110
        %1112 = vmatmul.bf16.gmra.mxu0 %v1032
        %v1113 = vpop.f32.mrf.mxu0
        %v1114 = vadd.f32 %v989, %v1113
        %v1115 = vpop.f32.mrf.mxu0
        %v1116 = vadd.f32 %v989, %v1115
        %1117 = vmatmul.bf16.gmra.mxu0 %v1033
        %v1118 = vpop.f32.mrf.mxu0
        %v1119 = vadd.f32 %v989, %v1118
        %v1120 = vpop.f32.mrf.mxu0
        %v1121 = vadd.f32 %v989, %v1120
        %1122 = vmatmul.bf16.gmra.mxu0 %v1034
        %v1123 = vpop.f32.mrf.mxu0
        %v1124 = vadd.f32 %v989, %v1123
        %v1125 = vpop.f32.mrf.mxu0
        %v1126 = vadd.f32 %v989, %v1125
        %1127 = vmatmul.bf16.gmra.mxu0 %v1035
        %v1128 = vpop.f32.mrf.mxu0
        %v1129 = vadd.f32 %v989, %v1128
        %v1130 = vpop.f32.mrf.mxu0
        %v1131 = vadd.f32 %v989, %v1130
        %1132 = vmatmul.bf16.gmra.mxu0 %v1036
        %v1133 = vpop.f32.mrf.mxu0
        %v1134 = vadd.f32 %v989, %v1133
        %v1135 = vpop.f32.mrf.mxu0
        %v1136 = vadd.f32 %v989, %v1135
        %1137 = vmatmul.bf16.gmra.mxu0 %v1037
        %v1138 = vpop.f32.mrf.mxu0
        %v1139 = vadd.f32 %v989, %v1138
        %v1140 = vpop.f32.mrf.mxu0
        %v1141 = vadd.f32 %v989, %v1140
        %1142 = vmatmul.bf16.gmra.mxu0 %v1038
        %v1143 = vpop.f32.mrf.mxu0
        %v1144 = vadd.f32 %v989, %v1143
        %v1145 = vpop.f32.mrf.mxu0
        %v1146 = vadd.f32 %v989, %v1145
        %1147 = vmatmul.bf16.gmra.mxu0 %v1039
        %v1148 = vpop.f32.mrf.mxu0
        %v1149 = vadd.f32 %v989, %v1148
        %v1150 = vpop.f32.mrf.mxu0
        %v1151 = vadd.f32 %v989, %v1150
        %1152 = vmatmul.bf16.gmra.mxu0 %v1040
        %v1153 = vpop.f32.mrf.mxu0
        %v1154 = vadd.f32 %v989, %v1153
        %v1155 = vpop.f32.mrf.mxu0
        %v1156 = vadd.f32 %v989, %v1155
        %1157 = vdwg.mxu0
        %v1158 = vmul.f32 %v1109, 0.2
        %v1159 = vmul.f32 %v1111, 0.2
        %v1160 = vmul.f32 %v1114, 0.2
        %v1161 = vmul.f32 %v1116, 0.2
        %v1162 = vmul.f32 %v1119, 0.2
        %v1163 = vmul.f32 %v1121, 0.2
        %v1164 = vmul.f32 %v1124, 0.2
        %v1165 = vmul.f32 %v1126, 0.2
        %v1166 = vmul.f32 %v1129, 0.2
        %v1167 = vmul.f32 %v1131, 0.2
        %v1168 = vmul.f32 %v1134, 0.2
        %v1169 = vmul.f32 %v1136, 0.2
        %v1170 = vmul.f32 %v1139, 0.2
        %v1171 = vmul.f32 %v1141, 0.2
        %v1172 = vmul.f32 %v1144, 0.2
        %v1173 = vmul.f32 %v1146, 0.2
        %v1174 = vmul.f32 %v1149, 0.2
        %v1175 = vmul.f32 %v1151, 0.2
        %v1176 = vmul.f32 %v1154, 0.2
        %v1177 = vmul.f32 %v1156, 0.2
        %v1178 = vmax.f32 %v1109, %v1158
        %v1179 = vmax.f32 %v1111, %v1159
        %v1180 = vmax.f32 %v1114, %v1160
        %v1181 = vmax.f32 %v1116, %v1161
        %v1182 = vmax.f32 %v1119, %v1162
        %v1183 = vmax.f32 %v1121, %v1163
        %v1184 = vmax.f32 %v1124, %v1164
        %v1185 = vmax.f32 %v1126, %v1165
        %v1186 = vmax.f32 %v1129, %v1166
        %v1187 = vmax.f32 %v1131, %v1167
        %v1188 = vmax.f32 %v1134, %v1168
        %v1189 = vmax.f32 %v1136, %v1169
        %v1190 = vmax.f32 %v1139, %v1170
        %v1191 = vmax.f32 %v1141, %v1171
        %v1192 = vmax.f32 %v1144, %v1172
        %v1193 = vmax.f32 %v1146, %v1173
        %v1194 = vmax.f32 %v1149, %v1174
        %v1195 = vmax.f32 %v1151, %v1175
        %v1196 = vmax.f32 %v1154, %v1176
        %v1197 = vmax.f32 %v1156, %v1177
        %v1198 = vpack.c.bf16 %v1178, %v1178
        %v1199 = vpack.c.bf16 %v1179, %v1179
        %v1200 = vpack.c.bf16 %v1180, %v1180
        %v1201 = vpack.c.bf16 %v1181, %v1181
        %v1202 = vpack.c.bf16 %v1182, %v1182
        %v1203 = vpack.c.bf16 %v1183, %v1183
        %v1204 = vpack.c.bf16 %v1184, %v1184
        %v1205 = vpack.c.bf16 %v1185, %v1185
        %v1206 = vpack.c.bf16 %v1186, %v1186
        %v1207 = vpack.c.bf16 %v1187, %v1187
        %v1208 = vpack.c.bf16 %v1188, %v1188
        %v1209 = vpack.c.bf16 %v1189, %v1189
        %v1210 = vpack.c.bf16 %v1190, %v1190
        %v1211 = vpack.c.bf16 %v1191, %v1191
        %v1212 = vpack.c.bf16 %v1192, %v1192
        %v1213 = vpack.c.bf16 %v1193, %v1193
        %v1214 = vpack.c.bf16 %v1194, %v1194
        %v1215 = vpack.c.bf16 %v1195, %v1195
        %v1216 = vpack.c.bf16 %v1196, %v1196
        %v1217 = vpack.c.bf16 %v1197, %v1197
        %v1218 = vld [vmem:[#allocation7] sm:$0xf]
        %v1219 = vld [vmem:[#allocation7 + $0x4] sm:$0xf]
        %v1220 = vld [vmem:[#allocation7 + $0x8] sm:$0xf]
        %v1221 = vld [vmem:[#allocation7 + $0xc] sm:$0xf]
        %v1222 = vld [vmem:[#allocation7 + $0x10] sm:$0xf]
        %v1223 = vld [vmem:[#allocation7 + $0x14] sm:$0xf]
        %v1224 = vld [vmem:[#allocation7 + $0x18] sm:$0xf]
        %v1225 = vld [vmem:[#allocation7 + $0x1c] sm:$0xf]
        %v1226 = vld [vmem:[#allocation7 + $0x20] sm:$0xf]
        %v1227 = vld [vmem:[#allocation7 + $0x24] sm:$0xf]
        %v1228 = vld [vmem:[#allocation7 + $0x28] sm:$0xf]
        %v1229 = vld [vmem:[#allocation7 + $0x2c] sm:$0xf]
        %v1230 = vld [vmem:[#allocation7 + $0x30] sm:$0xf]
        %v1231 = vld [vmem:[#allocation7 + $0x34] sm:$0xf]
        %v1232 = vld [vmem:[#allocation7 + $0x38] sm:$0xf]
        %v1233 = vld [vmem:[#allocation7 + $0x3c] sm:$0xf]
        %v1234 = vld [vmem:[%s11 + $0x3] sm:$0x1]
        %v1236 = vperm.slane %v1234, 0
        %v1238 = vunpack.c.h.b16 %v951
        %v1239 = vunpack.c.h.b16 %v952
        %v1240 = vunpack.c.h.b16 %v953
        %v1241 = vunpack.c.h.b16 %v954
        %v1242 = vunpack.c.h.b16 %v955
        %v1243 = vunpack.c.h.b16 %v956
        %v1244 = vunpack.c.h.b16 %v957
        %v1245 = vunpack.c.h.b16 %v958
        %v1246 = vunpack.c.h.b16 %v959
        %v1247 = vunpack.c.h.b16 %v960
        %v1248 = vunpack.c.h.b16 %v961
        %v1249 = vunpack.c.h.b16 %v962
        %v1250 = vunpack.c.h.b16 %v963
        %v1251 = vunpack.c.h.b16 %v964
        %v1252 = vunpack.c.h.b16 %v965
        %v1253 = vunpack.c.h.b16 %v966
        %v1254 = vunpack.c.h.b16 %v967
        %v1255 = vunpack.c.h.b16 %v968
        %v1256 = vunpack.c.h.b16 %v969
        %v1257 = vunpack.c.h.b16 %v970
        %v1258 = vpack.c.b16 %v1239, %v1238
        %v1259 = vpack.c.b16 %v1241, %v1240
        %v1260 = vpack.c.b16 %v1243, %v1242
        %v1261 = vpack.c.b16 %v1245, %v1244
        %v1262 = vpack.c.b16 %v1247, %v1246
        %v1263 = vpack.c.b16 %v1249, %v1248
        %v1264 = vpack.c.b16 %v1251, %v1250
        %v1265 = vpack.c.b16 %v1253, %v1252
        %v1266 = vpack.c.b16 %v1255, %v1254
        %v1267 = vpack.c.b16 %v1257, %v1256
        %v1294 = vunpack.c.l.b16 %v1218
        %v1295 = vunpack.c.l.b16 %v1219
        %v1296 = vunpack.c.l.b16 %v1220
        %v1297 = vunpack.c.l.b16 %v1221
        %v1298 = vunpack.c.l.b16 %v1222
        %v1299 = vunpack.c.l.b16 %v1223
        %v1300 = vunpack.c.l.b16 %v1224
        %v1301 = vunpack.c.l.b16 %v1225
        %v1302 = vunpack.c.l.b16 %v1226
        %v1303 = vunpack.c.l.b16 %v1227
        %v1304 = vunpack.c.l.b16 %v1228
        %v1305 = vunpack.c.l.b16 %v1229
        %v1306 = vunpack.c.l.b16 %v1230
        %v1307 = vunpack.c.l.b16 %v1231
        %v1308 = vunpack.c.l.b16 %v1232
        %v1309 = vunpack.c.l.b16 %v1233
        %v1310 = vpack.c.b16 %v1295, %v1294
        %v1311 = vpack.c.b16 %v1297, %v1296
        %v1312 = vpack.c.b16 %v1299, %v1298
        %v1313 = vpack.c.b16 %v1301, %v1300
        %v1314 = vpack.c.b16 %v1303, %v1302
        %v1315 = vpack.c.b16 %v1305, %v1304
        %v1316 = vpack.c.b16 %v1307, %v1306
        %v1317 = vpack.c.b16 %v1309, %v1308
        %1326 = vmatpush.bf16.msra.mxu0 %v1317
        %1327 = vmatpush.bf16.msra.mxu0 %v1316
        %1328 = vmatpush.bf16.msra.mxu0 %v1315
        %1329 = vmatpush.bf16.msra.mxu0 %v1314
        %1330 = vmatpush.bf16.msra.mxu0 %v1313
        %1331 = vmatpush.bf16.msra.mxu0 %v1312
        %1332 = vmatpush.bf16.msra.mxu0 %v1311
        %1333 = vmatpush.bf16.msra.mxu0 %v1310
        %1334 = vmatmul.bf16.gmra.mxu0 %v1258
        %v1335 = vpop.f32.mrf.mxu0
        %v1336 = vadd.f32 %v1236, %v1335
        %v1337 = vpop.f32.mrf.mxu0
        %v1338 = vadd.f32 %v1236, %v1337
        %1339 = vmatmul.bf16.gmra.mxu0 %v1259
        %v1340 = vpop.f32.mrf.mxu0
        %v1341 = vadd.f32 %v1236, %v1340
        %v1342 = vpop.f32.mrf.mxu0
        %v1343 = vadd.f32 %v1236, %v1342
        %1344 = vmatmul.bf16.gmra.mxu0 %v1260
        %v1345 = vpop.f32.mrf.mxu0
        %v1346 = vadd.f32 %v1236, %v1345
        %v1347 = vpop.f32.mrf.mxu0
        %v1348 = vadd.f32 %v1236, %v1347
        %1349 = vmatmul.bf16.gmra.mxu0 %v1261
        %v1350 = vpop.f32.mrf.mxu0
        %v1351 = vadd.f32 %v1236, %v1350
        %v1352 = vpop.f32.mrf.mxu0
        %v1353 = vadd.f32 %v1236, %v1352
        %1354 = vmatmul.bf16.gmra.mxu0 %v1262
        %v1355 = vpop.f32.mrf.mxu0
        %v1356 = vadd.f32 %v1236, %v1355
        %v1357 = vpop.f32.mrf.mxu0
        %v1358 = vadd.f32 %v1236, %v1357
        %1359 = vmatmul.bf16.gmra.mxu0 %v1263
        %v1360 = vpop.f32.mrf.mxu0
        %v1361 = vadd.f32 %v1236, %v1360
        %v1362 = vpop.f32.mrf.mxu0
        %v1363 = vadd.f32 %v1236, %v1362
        %1364 = vmatmul.bf16.gmra.mxu0 %v1264
        %v1365 = vpop.f32.mrf.mxu0
        %v1366 = vadd.f32 %v1236, %v1365
        %v1367 = vpop.f32.mrf.mxu0
        %v1368 = vadd.f32 %v1236, %v1367
        %1369 = vmatmul.bf16.gmra.mxu0 %v1265
        %v1370 = vpop.f32.mrf.mxu0
        %v1371 = vadd.f32 %v1236, %v1370
        %v1372 = vpop.f32.mrf.mxu0
        %v1373 = vadd.f32 %v1236, %v1372
        %1374 = vmatmul.bf16.gmra.mxu0 %v1266
        %v1375 = vpop.f32.mrf.mxu0
        %v1376 = vadd.f32 %v1236, %v1375
        %v1377 = vpop.f32.mrf.mxu0
        %v1378 = vadd.f32 %v1236, %v1377
        %1379 = vmatmul.bf16.gmra.mxu0 %v1267
        %v1380 = vpop.f32.mrf.mxu0
        %v1381 = vadd.f32 %v1236, %v1380
        %v1382 = vpop.f32.mrf.mxu0
        %v1383 = vadd.f32 %v1236, %v1382
        %1384 = vdwg.mxu0
        %v1385 = vmul.f32 %v1336, 0.2
        %v1386 = vmul.f32 %v1338, 0.2
        %v1387 = vmul.f32 %v1341, 0.2
        %v1388 = vmul.f32 %v1343, 0.2
        %v1389 = vmul.f32 %v1346, 0.2
        %v1390 = vmul.f32 %v1348, 0.2
        %v1391 = vmul.f32 %v1351, 0.2
        %v1392 = vmul.f32 %v1353, 0.2
        %v1393 = vmul.f32 %v1356, 0.2
        %v1394 = vmul.f32 %v1358, 0.2
        %v1395 = vmul.f32 %v1361, 0.2
        %v1396 = vmul.f32 %v1363, 0.2
        %v1397 = vmul.f32 %v1366, 0.2
        %v1398 = vmul.f32 %v1368, 0.2
        %v1399 = vmul.f32 %v1371, 0.2
        %v1400 = vmul.f32 %v1373, 0.2
        %v1401 = vmul.f32 %v1376, 0.2
        %v1402 = vmul.f32 %v1378, 0.2
        %v1403 = vmul.f32 %v1381, 0.2
        %v1404 = vmul.f32 %v1383, 0.2
        %v1405 = vmax.f32 %v1336, %v1385
        %v1406 = vmax.f32 %v1338, %v1386
        %v1407 = vmax.f32 %v1341, %v1387
        %v1408 = vmax.f32 %v1343, %v1388
        %v1409 = vmax.f32 %v1346, %v1389
        %v1410 = vmax.f32 %v1348, %v1390
        %v1411 = vmax.f32 %v1351, %v1391
        %v1412 = vmax.f32 %v1353, %v1392
        %v1413 = vmax.f32 %v1356, %v1393
        %v1414 = vmax.f32 %v1358, %v1394
        %v1415 = vmax.f32 %v1361, %v1395
        %v1416 = vmax.f32 %v1363, %v1396
        %v1417 = vmax.f32 %v1366, %v1397
        %v1418 = vmax.f32 %v1368, %v1398
        %v1419 = vmax.f32 %v1371, %v1399
        %v1420 = vmax.f32 %v1373, %v1400
        %v1421 = vmax.f32 %v1376, %v1401
        %v1422 = vmax.f32 %v1378, %v1402
        %v1423 = vmax.f32 %v1381, %v1403
        %v1424 = vmax.f32 %v1383, %v1404
        %v1425 = vpack.c.bf16 %v1406, %v1405
        %v1426 = vpack.c.bf16 %v1408, %v1407
        %v1427 = vpack.c.bf16 %v1410, %v1409
        %v1428 = vpack.c.bf16 %v1412, %v1411
        %v1429 = vpack.c.bf16 %v1414, %v1413
        %v1430 = vpack.c.bf16 %v1416, %v1415
        %v1431 = vpack.c.bf16 %v1418, %v1417
        %v1432 = vpack.c.bf16 %v1420, %v1419
        %v1433 = vpack.c.bf16 %v1422, %v1421
        %v1434 = vpack.c.bf16 %v1424, %v1423
        %v1435 = vld [vmem:[#allocation8] sm:$0xf]
        %v1436 = vld [vmem:[#allocation8 + $0x4] sm:$0xf]
        %v1437 = vld [vmem:[#allocation8 + $0x8] sm:$0xf]
        %v1438 = vld [vmem:[#allocation8 + $0xc] sm:$0xf]
        %v1439 = vld [vmem:[#allocation8 + $0x10] sm:$0xf]
        %v1440 = vld [vmem:[#allocation8 + $0x14] sm:$0xf]
        %v1441 = vld [vmem:[#allocation8 + $0x18] sm:$0xf]
        %v1442 = vld [vmem:[#allocation8 + $0x1c] sm:$0xf]
        %v1443 = vld [vmem:[#allocation8 + $0x20] sm:$0xf]
        %v1444 = vld [vmem:[#allocation8 + $0x24] sm:$0xf]
        %v1445 = vld [vmem:[#allocation8 + $0x28] sm:$0xf]
        %v1446 = vld [vmem:[#allocation8 + $0x2c] sm:$0xf]
        %v1447 = vld [vmem:[#allocation8 + $0x30] sm:$0xf]
        %v1448 = vld [vmem:[#allocation8 + $0x34] sm:$0xf]
        %v1449 = vld [vmem:[#allocation8 + $0x38] sm:$0xf]
        %v1450 = vld [vmem:[#allocation8 + $0x3c] sm:$0xf]
        %v1451 = vld [vmem:[%s11 + $0x4] sm:$0x1]
        %v1453 = vperm.slane %v1451, 0
        %v1471 = vunpack.c.l.b16 %v1435
        %v1472 = vunpack.c.l.b16 %v1436
        %v1473 = vunpack.c.l.b16 %v1437
        %v1474 = vunpack.c.l.b16 %v1438
        %v1475 = vunpack.c.l.b16 %v1439
        %v1476 = vunpack.c.l.b16 %v1440
        %v1477 = vunpack.c.l.b16 %v1441
        %v1478 = vunpack.c.l.b16 %v1442
        %v1479 = vunpack.c.l.b16 %v1443
        %v1480 = vunpack.c.l.b16 %v1444
        %v1481 = vunpack.c.l.b16 %v1445
        %v1482 = vunpack.c.l.b16 %v1446
        %v1483 = vunpack.c.l.b16 %v1447
        %v1484 = vunpack.c.l.b16 %v1448
        %v1485 = vunpack.c.l.b16 %v1449
        %v1486 = vunpack.c.l.b16 %v1450
        %v1487 = vpack.c.b16 %v1472, %v1471
        %v1488 = vpack.c.b16 %v1474, %v1473
        %v1489 = vpack.c.b16 %v1476, %v1475
        %v1490 = vpack.c.b16 %v1478, %v1477
        %v1491 = vpack.c.b16 %v1480, %v1479
        %v1492 = vpack.c.b16 %v1482, %v1481
        %v1493 = vpack.c.b16 %v1484, %v1483
        %v1494 = vpack.c.b16 %v1486, %v1485
        %1503 = vmatpush.bf16.msra.mxu0 %v1494
        %1504 = vmatpush.bf16.msra.mxu0 %v1493
        %1505 = vmatpush.bf16.msra.mxu0 %v1492
        %1506 = vmatpush.bf16.msra.mxu0 %v1491
        %1507 = vmatpush.bf16.msra.mxu0 %v1490
        %1508 = vmatpush.bf16.msra.mxu0 %v1489
        %1509 = vmatpush.bf16.msra.mxu0 %v1488
        %1510 = vmatpush.bf16.msra.mxu0 %v1487
        %1511 = vmatmul.bf16.gmra.mxu0 %v1425
        %v1512 = vpop.f32.mrf.mxu0
        %v1513 = vadd.f32 %v1453, %v1512
        %v1514 = vpop.f32.mrf.mxu0
        %v1515 = vadd.f32 %v1453, %v1514
        %1516 = vmatmul.bf16.gmra.mxu0 %v1426
        %v1517 = vpop.f32.mrf.mxu0
        %v1518 = vadd.f32 %v1453, %v1517
        %v1519 = vpop.f32.mrf.mxu0
        %v1520 = vadd.f32 %v1453, %v1519
        %1521 = vmatmul.bf16.gmra.mxu0 %v1427
        %v1522 = vpop.f32.mrf.mxu0
        %v1523 = vadd.f32 %v1453, %v1522
        %v1524 = vpop.f32.mrf.mxu0
        %v1525 = vadd.f32 %v1453, %v1524
        %1526 = vmatmul.bf16.gmra.mxu0 %v1428
        %v1527 = vpop.f32.mrf.mxu0
        %v1528 = vadd.f32 %v1453, %v1527
        %v1529 = vpop.f32.mrf.mxu0
        %v1530 = vadd.f32 %v1453, %v1529
        %1531 = vmatmul.bf16.gmra.mxu0 %v1429
        %v1532 = vpop.f32.mrf.mxu0
        %v1533 = vadd.f32 %v1453, %v1532
        %v1534 = vpop.f32.mrf.mxu0
        %v1535 = vadd.f32 %v1453, %v1534
        %1536 = vmatmul.bf16.gmra.mxu0 %v1430
        %v1537 = vpop.f32.mrf.mxu0
        %v1538 = vadd.f32 %v1453, %v1537
        %v1539 = vpop.f32.mrf.mxu0
        %v1540 = vadd.f32 %v1453, %v1539
        %1541 = vmatmul.bf16.gmra.mxu0 %v1431
        %v1542 = vpop.f32.mrf.mxu0
        %v1543 = vadd.f32 %v1453, %v1542
        %v1544 = vpop.f32.mrf.mxu0
        %v1545 = vadd.f32 %v1453, %v1544
        %1546 = vmatmul.bf16.gmra.mxu0 %v1432
        %v1547 = vpop.f32.mrf.mxu0
        %v1548 = vadd.f32 %v1453, %v1547
        %v1549 = vpop.f32.mrf.mxu0
        %v1550 = vadd.f32 %v1453, %v1549
        %1551 = vmatmul.bf16.gmra.mxu0 %v1433
        %v1552 = vpop.f32.mrf.mxu0
        %v1553 = vadd.f32 %v1453, %v1552
        %v1554 = vpop.f32.mrf.mxu0
        %v1555 = vadd.f32 %v1453, %v1554
        %1556 = vmatmul.bf16.gmra.mxu0 %v1434
        %v1557 = vpop.f32.mrf.mxu0
        %v1558 = vadd.f32 %v1453, %v1557
        %v1559 = vpop.f32.mrf.mxu0
        %v1560 = vadd.f32 %v1453, %v1559
        %1561 = vdwg.mxu0
        %v1562 = vmul.f32 %v1513, 0.2
        %v1563 = vmul.f32 %v1515, 0.2
        %v1564 = vmul.f32 %v1518, 0.2
        %v1565 = vmul.f32 %v1520, 0.2
        %v1566 = vmul.f32 %v1523, 0.2
        %v1567 = vmul.f32 %v1525, 0.2
        %v1568 = vmul.f32 %v1528, 0.2
        %v1569 = vmul.f32 %v1530, 0.2
        %v1570 = vmul.f32 %v1533, 0.2
        %v1571 = vmul.f32 %v1535, 0.2
        %v1572 = vmul.f32 %v1538, 0.2
        %v1573 = vmul.f32 %v1540, 0.2
        %v1574 = vmul.f32 %v1543, 0.2
        %v1575 = vmul.f32 %v1545, 0.2
        %v1576 = vmul.f32 %v1548, 0.2
        %v1577 = vmul.f32 %v1550, 0.2
        %v1578 = vmul.f32 %v1553, 0.2
        %v1579 = vmul.f32 %v1555, 0.2
        %v1580 = vmul.f32 %v1558, 0.2
        %v1581 = vmul.f32 %v1560, 0.2
        %v1582 = vmax.f32 %v1513, %v1562
        %v1583 = vmax.f32 %v1515, %v1563
        %v1584 = vmax.f32 %v1518, %v1564
        %v1585 = vmax.f32 %v1520, %v1565
        %v1586 = vmax.f32 %v1523, %v1566
        %v1587 = vmax.f32 %v1525, %v1567
        %v1588 = vmax.f32 %v1528, %v1568
        %v1589 = vmax.f32 %v1530, %v1569
        %v1590 = vmax.f32 %v1533, %v1570
        %v1591 = vmax.f32 %v1535, %v1571
        %v1592 = vmax.f32 %v1538, %v1572
        %v1593 = vmax.f32 %v1540, %v1573
        %v1594 = vmax.f32 %v1543, %v1574
        %v1595 = vmax.f32 %v1545, %v1575
        %v1596 = vmax.f32 %v1548, %v1576
        %v1597 = vmax.f32 %v1550, %v1577
        %v1598 = vmax.f32 %v1553, %v1578
        %v1599 = vmax.f32 %v1555, %v1579
        %v1600 = vmax.f32 %v1558, %v1580
        %v1601 = vmax.f32 %v1560, %v1581
        %v1602 = vpack.c.bf16 %v1582, %v1582
        %v1603 = vpack.c.bf16 %v1583, %v1583
        %v1604 = vpack.c.bf16 %v1584, %v1584
        %v1605 = vpack.c.bf16 %v1585, %v1585
        %v1606 = vpack.c.bf16 %v1586, %v1586
        %v1607 = vpack.c.bf16 %v1587, %v1587
        %v1608 = vpack.c.bf16 %v1588, %v1588
        %v1609 = vpack.c.bf16 %v1589, %v1589
        %v1610 = vpack.c.bf16 %v1590, %v1590
        %v1611 = vpack.c.bf16 %v1591, %v1591
        %v1612 = vpack.c.bf16 %v1592, %v1592
        %v1613 = vpack.c.bf16 %v1593, %v1593
        %v1614 = vpack.c.bf16 %v1594, %v1594
        %v1615 = vpack.c.bf16 %v1595, %v1595
        %v1616 = vpack.c.bf16 %v1596, %v1596
        %v1617 = vpack.c.bf16 %v1597, %v1597
        %v1618 = vpack.c.bf16 %v1598, %v1598
        %v1619 = vpack.c.bf16 %v1599, %v1599
        %v1620 = vpack.c.bf16 %v1600, %v1600
        %v1621 = vpack.c.bf16 %v1601, %v1601
        %v1622 = vld [vmem:[%s2] sm:$0xf]
        %v1623 = vld [vmem:[#allocation10] sm:$0xf]
        %v1624 = vld [vmem:[#allocation10 + $0x4] sm:$0xf]
        %v1625 = vld [vmem:[#allocation10 + $0x8] sm:$0xf]
        %v1626 = vld [vmem:[#allocation10 + $0xc] sm:$0xf]
        %v1627 = vld [vmem:[#allocation10 + $0x10] sm:$0xf]
        %v1628 = vld [vmem:[#allocation10 + $0x14] sm:$0xf]
        %v1629 = vld [vmem:[#allocation10 + $0x18] sm:$0xf]
        %v1630 = vld [vmem:[#allocation10 + $0x1c] sm:$0xf]
        %v1631 = vld [vmem:[#allocation10 + $0x20] sm:$0xf]
        %v1632 = vld [vmem:[#allocation10 + $0x24] sm:$0xf]
        %v1633 = vld [vmem:[#allocation10 + $0x28] sm:$0xf]
        %v1634 = vld [vmem:[#allocation10 + $0x2c] sm:$0xf]
        %v1635 = vld [vmem:[#allocation10 + $0x30] sm:$0xf]
        %v1636 = vld [vmem:[#allocation10 + $0x34] sm:$0xf]
        %v1637 = vld [vmem:[#allocation10 + $0x38] sm:$0xf]
        %v1638 = vld [vmem:[#allocation10 + $0x3c] sm:$0xf]
        %v1639 = vld [vmem:[%s11 + $0x5] sm:$0x1]
        %v1641 = vperm.slane %v1639, 0
        %v1659 = vunpack.c.l.b16 %v1623
        %v1660 = vunpack.c.l.b16 %v1624
        %v1661 = vunpack.c.l.b16 %v1625
        %v1662 = vunpack.c.l.b16 %v1626
        %v1663 = vunpack.c.l.b16 %v1627
        %v1664 = vunpack.c.l.b16 %v1628
        %v1665 = vunpack.c.l.b16 %v1629
        %v1666 = vunpack.c.l.b16 %v1630
        %v1667 = vunpack.c.l.b16 %v1631
        %v1668 = vunpack.c.l.b16 %v1632
        %v1669 = vunpack.c.l.b16 %v1633
        %v1670 = vunpack.c.l.b16 %v1634
        %v1671 = vunpack.c.l.b16 %v1635
        %v1672 = vunpack.c.l.b16 %v1636
        %v1673 = vunpack.c.l.b16 %v1637
        %v1674 = vunpack.c.l.b16 %v1638
        %v1675 = vpack.c.b16 %v1660, %v1659
        %v1676 = vpack.c.b16 %v1662, %v1661
        %v1677 = vpack.c.b16 %v1664, %v1663
        %v1678 = vpack.c.b16 %v1666, %v1665
        %v1679 = vpack.c.b16 %v1668, %v1667
        %v1680 = vpack.c.b16 %v1670, %v1669
        %v1681 = vpack.c.b16 %v1672, %v1671
        %v1682 = vpack.c.b16 %v1674, %v1673
        %1691 = vmatpush.bf16.msra.mxu0 %v1682
        %1692 = vmatpush.bf16.msra.mxu0 %v1681
        %1693 = vmatpush.bf16.msra.mxu0 %v1680
        %1694 = vmatpush.bf16.msra.mxu0 %v1679
        %1695 = vmatpush.bf16.msra.mxu0 %v1678
        %1696 = vmatpush.bf16.msra.mxu0 %v1677
        %1697 = vmatpush.bf16.msra.mxu0 %v1676
        %1698 = vmatpush.bf16.msra.mxu0 %v1675
        %1699 = vmatmul.bf16.gmra.mxu0 %v1622
        %v1700 = vpop.f32.mrf.mxu0
        %v1701 = vadd.f32 %v1641, %v1700
        %v1702 = vpop.f32.mrf.mxu0
        %1703 = vdwg.mxu0
        %v1704 = vmul.f32 %v1701, 0.2
        %v1705 = vmax.f32 %v1701, %v1704
        %v1706 = vpack.c.bf16 %v1705, %v1705
        %v1707 = vld [vmem:[#allocation11] sm:$0xf]
        %v1708 = vld [vmem:[#allocation11 + $0x4] sm:$0xf]
        %v1709 = vld [vmem:[#allocation11 + $0x8] sm:$0xf]
        %v1710 = vld [vmem:[#allocation11 + $0xc] sm:$0xf]
        %v1711 = vld [vmem:[#allocation11 + $0x10] sm:$0xf]
        %v1712 = vld [vmem:[#allocation11 + $0x14] sm:$0xf]
        %v1713 = vld [vmem:[#allocation11 + $0x18] sm:$0xf]
        %v1714 = vld [vmem:[#allocation11 + $0x1c] sm:$0xf]
        %v1715 = vld [vmem:[#allocation11 + $0x20] sm:$0xf]
        %v1716 = vld [vmem:[#allocation11 + $0x24] sm:$0xf]
        %v1717 = vld [vmem:[#allocation11 + $0x28] sm:$0xf]
        %v1718 = vld [vmem:[#allocation11 + $0x2c] sm:$0xf]
        %v1719 = vld [vmem:[#allocation11 + $0x30] sm:$0xf]
        %v1720 = vld [vmem:[#allocation11 + $0x34] sm:$0xf]
        %v1721 = vld [vmem:[#allocation11 + $0x38] sm:$0xf]
        %v1722 = vld [vmem:[#allocation11 + $0x3c] sm:$0xf]
        %v1723 = vld [vmem:[%s11 + $0x6] sm:$0x1]
        %v1725 = vperm.slane %v1723, 0
        %v1743 = vunpack.c.l.b16 %v1707
        %v1744 = vunpack.c.l.b16 %v1708
        %v1745 = vunpack.c.l.b16 %v1709
        %v1746 = vunpack.c.l.b16 %v1710
        %v1747 = vunpack.c.l.b16 %v1711
        %v1748 = vunpack.c.l.b16 %v1712
        %v1749 = vunpack.c.l.b16 %v1713
        %v1750 = vunpack.c.l.b16 %v1714
        %v1751 = vunpack.c.l.b16 %v1715
        %v1752 = vunpack.c.l.b16 %v1716
        %v1753 = vunpack.c.l.b16 %v1717
        %v1754 = vunpack.c.l.b16 %v1718
        %v1755 = vunpack.c.l.b16 %v1719
        %v1756 = vunpack.c.l.b16 %v1720
        %v1757 = vunpack.c.l.b16 %v1721
        %v1758 = vunpack.c.l.b16 %v1722
        %v1759 = vpack.c.b16 %v1744, %v1743
        %v1760 = vpack.c.b16 %v1746, %v1745
        %v1761 = vpack.c.b16 %v1748, %v1747
        %v1762 = vpack.c.b16 %v1750, %v1749
        %v1763 = vpack.c.b16 %v1752, %v1751
        %v1764 = vpack.c.b16 %v1754, %v1753
        %v1765 = vpack.c.b16 %v1756, %v1755
        %v1766 = vpack.c.b16 %v1758, %v1757
        %1775 = vmatpush.bf16.msra.mxu0 %v1766
        %1776 = vmatpush.bf16.msra.mxu0 %v1765
        %1777 = vmatpush.bf16.msra.mxu0 %v1764
        %1778 = vmatpush.bf16.msra.mxu0 %v1763
        %1779 = vmatpush.bf16.msra.mxu0 %v1762
        %1780 = vmatpush.bf16.msra.mxu0 %v1761
        %1781 = vmatpush.bf16.msra.mxu0 %v1760
        %1782 = vmatpush.bf16.msra.mxu0 %v1759
        %1783 = vmatmul.bf16.gmra.mxu0 %v1706
        %v1784 = vpop.f32.mrf.mxu0
        %v1785 = vadd.f32 %v1725, %v1784
        %v1786 = vpop.f32.mrf.mxu0
        %1787 = vdwg.mxu0
        %v1788 = vmul.f32 %v1785, 0.2
        %v1789 = vmax.f32 %v1785, %v1788
        %v1790 = vpack.c.bf16 %v1789, %v1789
        %v1791 = vld [vmem:[%s567] sm:$0xf]
        %v1792 = vld [vmem:[%s567 + $0x4] sm:$0xf]
        %v1793 = vld [vmem:[%s567 + $0x8] sm:$0xf]
        %v1794 = vld [vmem:[%s567 + $0xc] sm:$0xf]
        %v1795 = vld [vmem:[%s567 + $0x10] sm:$0xf]
        %v1796 = vld [vmem:[%s567 + $0x14] sm:$0xf]
        %v1797 = vld [vmem:[%s567 + $0x18] sm:$0xf]
        %v1798 = vld [vmem:[%s567 + $0x1c] sm:$0xf]
        %v1799 = vld [vmem:[%s567 + $0x20] sm:$0xf]
        %v1800 = vld [vmem:[%s567 + $0x24] sm:$0xf]
        %v1801 = vld [vmem:[%s567 + $0x28] sm:$0xf]
        %v1802 = vld [vmem:[%s567 + $0x2c] sm:$0xf]
        %v1803 = vld [vmem:[%s567 + $0x30] sm:$0xf]
        %v1804 = vld [vmem:[%s567 + $0x34] sm:$0xf]
        %v1805 = vld [vmem:[%s567 + $0x38] sm:$0xf]
        %v1806 = vld [vmem:[%s567 + $0x3c] sm:$0xf]
        %v1807 = vld [vmem:[%s567 + $0x40] sm:$0xf]
        %v1808 = vld [vmem:[%s567 + $0x44] sm:$0xf]
        %v1809 = vld [vmem:[%s567 + $0x48] sm:$0xf]
        %v1810 = vld [vmem:[%s567 + $0x4c] sm:$0xf]
        %v1831 = vunpack.c.l.b16 %v1791
        %v1832 = vunpack.c.l.b16 %v1792
        %v1833 = vunpack.c.l.b16 %v1793
        %v1834 = vunpack.c.l.b16 %v1794
        %v1835 = vunpack.c.l.b16 %v1795
        %v1836 = vunpack.c.l.b16 %v1796
        %v1837 = vunpack.c.l.b16 %v1797
        %v1838 = vunpack.c.l.b16 %v1798
        %v1839 = vunpack.c.l.b16 %v1799
        %v1840 = vunpack.c.l.b16 %v1800
        %v1841 = vunpack.c.l.b16 %v1801
        %v1842 = vunpack.c.l.b16 %v1802
        %v1843 = vunpack.c.l.b16 %v1803
        %v1844 = vunpack.c.l.b16 %v1804
        %v1845 = vunpack.c.l.b16 %v1805
        %v1846 = vunpack.c.l.b16 %v1806
        %v1847 = vunpack.c.l.b16 %v1807
        %v1848 = vunpack.c.l.b16 %v1808
        %v1849 = vunpack.c.l.b16 %v1809
        %v1850 = vunpack.c.l.b16 %v1810
        %v1851 = vpack.c.b16 %v1832, %v1831
        %v1852 = vpack.c.b16 %v1834, %v1833
        %v1853 = vpack.c.b16 %v1836, %v1835
        %v1854 = vpack.c.b16 %v1838, %v1837
        %v1855 = vpack.c.b16 %v1840, %v1839
        %v1856 = vpack.c.b16 %v1842, %v1841
        %v1857 = vpack.c.b16 %v1844, %v1843
        %v1858 = vpack.c.b16 %v1846, %v1845
        %v1859 = vpack.c.b16 %v1848, %v1847
        %v1860 = vpack.c.b16 %v1850, %v1849
        %vm1861 = vcmask 64512
        %v1863 = vsel %vm1861, %v1851, 0
        %v1866 = vsel %vm1861, %v1852, 0
        %v1869 = vsel %vm1861, %v1853, 0
        %v1872 = vsel %vm1861, %v1854, 0
        %v1875 = vsel %vm1861, %v1855, 0
        %v1878 = vsel %vm1861, %v1856, 0
        %v1881 = vsel %vm1861, %v1857, 0
        %v1884 = vsel %vm1861, %v1858, 0
        %v1887 = vsel %vm1861, %v1859, 0
        %v1890 = vsel %vm1861, %v1860, 0
        %vm1892 = vcmask 1043456
        %v1894 = vsel %vm1892, %v1790, 0
        %1896 = vmatpush.bf16.msra.mxu0 0
        %1897 = vmatpush.bf16.msra.mxu0 0
        %1898 = vmatpush.bf16.msra.mxu0 0
        %1899 = vmatpush.bf16.msra.mxu0 0
        %1900 = vmatpush.bf16.msra.mxu0 0
        %1901 = vmatpush.bf16.msra.mxu0 0
        %1902 = vmatpush.bf16.msra.mxu0 0
        %1903 = vmatpush.bf16.msra.mxu0 %v1894
        %1904 = vmatmul.bf16.gmra.mxu0 %v1863
        %v1905 = vpop.f32.mrf.mxu0
        %v1906 = vadd.f32 0.0, %v1905
        %v1907 = vpop.f32.mrf.mxu0
        %v1908 = vadd.f32 0.0, %v1907
        %1909 = vmatmul.bf16.gmra.mxu0 %v1866
        %v1910 = vpop.f32.mrf.mxu0
        %v1911 = vadd.f32 0.0, %v1910
        %v1912 = vpop.f32.mrf.mxu0
        %v1913 = vadd.f32 0.0, %v1912
        %1914 = vmatmul.bf16.gmra.mxu0 %v1869
        %v1915 = vpop.f32.mrf.mxu0
        %v1916 = vadd.f32 0.0, %v1915
        %v1917 = vpop.f32.mrf.mxu0
        %v1918 = vadd.f32 0.0, %v1917
        %1919 = vmatmul.bf16.gmra.mxu0 %v1872
        %v1920 = vpop.f32.mrf.mxu0
        %v1921 = vadd.f32 0.0, %v1920
        %v1922 = vpop.f32.mrf.mxu0
        %v1923 = vadd.f32 0.0, %v1922
        %1924 = vmatmul.bf16.gmra.mxu0 %v1875
        %v1925 = vpop.f32.mrf.mxu0
        %v1926 = vadd.f32 0.0, %v1925
        %v1927 = vpop.f32.mrf.mxu0
        %v1928 = vadd.f32 0.0, %v1927
        %1929 = vmatmul.bf16.gmra.mxu0 %v1878
        %v1930 = vpop.f32.mrf.mxu0
        %v1931 = vadd.f32 0.0, %v1930
        %v1932 = vpop.f32.mrf.mxu0
        %v1933 = vadd.f32 0.0, %v1932
        %1934 = vmatmul.bf16.gmra.mxu0 %v1881
        %v1935 = vpop.f32.mrf.mxu0
        %v1936 = vadd.f32 0.0, %v1935
        %v1937 = vpop.f32.mrf.mxu0
        %v1938 = vadd.f32 0.0, %v1937
        %1939 = vmatmul.bf16.gmra.mxu0 %v1884
        %v1940 = vpop.f32.mrf.mxu0
        %v1941 = vadd.f32 0.0, %v1940
        %v1942 = vpop.f32.mrf.mxu0
        %v1943 = vadd.f32 0.0, %v1942
        %1944 = vmatmul.bf16.gmra.mxu0 %v1887
        %v1945 = vpop.f32.mrf.mxu0
        %v1946 = vadd.f32 0.0, %v1945
        %v1947 = vpop.f32.mrf.mxu0
        %v1948 = vadd.f32 0.0, %v1947
        %1949 = vmatmul.bf16.gmra.mxu0 %v1890
        %v1950 = vpop.f32.mrf.mxu0
        %v1951 = vadd.f32 0.0, %v1950
        %v1952 = vpop.f32.mrf.mxu0
        %v1953 = vadd.f32 0.0, %v1952
        %1954 = vdwg.mxu0
        %v1955 = vpack.c.bf16 %v1906, %v1906
        %v1956 = vpack.c.bf16 %v1908, %v1908
        %v1957 = vpack.c.bf16 %v1911, %v1911
        %v1958 = vpack.c.bf16 %v1913, %v1913
        %v1959 = vpack.c.bf16 %v1916, %v1916
        %v1960 = vpack.c.bf16 %v1918, %v1918
        %v1961 = vpack.c.bf16 %v1921, %v1921
        %v1962 = vpack.c.bf16 %v1923, %v1923
        %v1963 = vpack.c.bf16 %v1926, %v1926
        %v1964 = vpack.c.bf16 %v1928, %v1928
        %v1965 = vpack.c.bf16 %v1931, %v1931
        %v1966 = vpack.c.bf16 %v1933, %v1933
        %v1967 = vpack.c.bf16 %v1936, %v1936
        %v1968 = vpack.c.bf16 %v1938, %v1938
        %v1969 = vpack.c.bf16 %v1941, %v1941
        %v1970 = vpack.c.bf16 %v1943, %v1943
        %v1971 = vpack.c.bf16 %v1946, %v1946
        %v1972 = vpack.c.bf16 %v1948, %v1948
        %v1973 = vpack.c.bf16 %v1951, %v1951
        %v1974 = vpack.c.bf16 %v1953, %v1953
        %v1995 = vunpack.c.l.b16 %v1198
        %v1996 = vunpack.c.l.b16 %v1199
        %v1997 = vunpack.c.l.b16 %v1200
        %v1998 = vunpack.c.l.b16 %v1201
        %v1999 = vunpack.c.l.b16 %v1202
        %v2000 = vunpack.c.l.b16 %v1203
        %v2001 = vunpack.c.l.b16 %v1204
        %v2002 = vunpack.c.l.b16 %v1205
        %v2003 = vunpack.c.l.b16 %v1206
        %v2004 = vunpack.c.l.b16 %v1207
        %v2005 = vunpack.c.l.b16 %v1208
        %v2006 = vunpack.c.l.b16 %v1209
        %v2007 = vunpack.c.l.b16 %v1210
        %v2008 = vunpack.c.l.b16 %v1211
        %v2009 = vunpack.c.l.b16 %v1212
        %v2010 = vunpack.c.l.b16 %v1213
        %v2011 = vunpack.c.l.b16 %v1214
        %v2012 = vunpack.c.l.b16 %v1215
        %v2013 = vunpack.c.l.b16 %v1216
        %v2014 = vunpack.c.l.b16 %v1217
        %v2015 = vpack.c.b16 %v1996, %v1995
        %v2016 = vpack.c.b16 %v1998, %v1997
        %v2017 = vpack.c.b16 %v2000, %v1999
        %v2018 = vpack.c.b16 %v2002, %v2001
        %v2019 = vpack.c.b16 %v2004, %v2003
        %v2020 = vpack.c.b16 %v2006, %v2005
        %v2021 = vpack.c.b16 %v2008, %v2007
        %v2022 = vpack.c.b16 %v2010, %v2009
        %v2023 = vpack.c.b16 %v2012, %v2011
        %v2024 = vpack.c.b16 %v2014, %v2013
        %v2055 = vunpack.c.l.b16 %v1955
        %v2056 = vunpack.c.l.b16 %v1956
        %v2057 = vunpack.c.l.b16 %v1957
        %v2058 = vunpack.c.l.b16 %v1958
        %v2059 = vunpack.c.l.b16 %v1959
        %v2060 = vunpack.c.l.b16 %v1960
        %v2061 = vunpack.c.l.b16 %v1961
        %v2062 = vunpack.c.l.b16 %v1962
        %v2063 = vunpack.c.l.b16 %v1963
        %v2064 = vunpack.c.l.b16 %v1964
        %v2065 = vunpack.c.l.b16 %v1965
        %v2066 = vunpack.c.l.b16 %v1966
        %v2067 = vunpack.c.l.b16 %v1967
        %v2068 = vunpack.c.l.b16 %v1968
        %v2069 = vunpack.c.l.b16 %v1969
        %v2070 = vunpack.c.l.b16 %v1970
        %v2071 = vunpack.c.l.b16 %v1971
        %v2072 = vunpack.c.l.b16 %v1972
        %v2073 = vunpack.c.l.b16 %v1973
        %v2074 = vunpack.c.l.b16 %v1974
        %v2075 = vpack.c.b16 %v2056, %v2055
        %v2076 = vpack.c.b16 %v2058, %v2057
        %v2077 = vpack.c.b16 %v2060, %v2059
        %v2078 = vpack.c.b16 %v2062, %v2061
        %v2079 = vpack.c.b16 %v2064, %v2063
        %v2080 = vpack.c.b16 %v2066, %v2065
        %v2081 = vpack.c.b16 %v2068, %v2067
        %v2082 = vpack.c.b16 %v2070, %v2069
        %v2083 = vpack.c.b16 %v2072, %v2071
        %v2084 = vpack.c.b16 %v2074, %v2073
        %v2115 = vunpack.c.l.b16 %v1602
        %v2116 = vunpack.c.l.b16 %v1603
        %v2117 = vunpack.c.l.b16 %v1604
        %v2118 = vunpack.c.l.b16 %v1605
        %v2119 = vunpack.c.l.b16 %v1606
        %v2120 = vunpack.c.l.b16 %v1607
        %v2121 = vunpack.c.l.b16 %v1608
        %v2122 = vunpack.c.l.b16 %v1609
        %v2123 = vunpack.c.l.b16 %v1610
        %v2124 = vunpack.c.l.b16 %v1611
        %v2125 = vunpack.c.l.b16 %v1612
        %v2126 = vunpack.c.l.b16 %v1613
        %v2127 = vunpack.c.l.b16 %v1614
        %v2128 = vunpack.c.l.b16 %v1615
        %v2129 = vunpack.c.l.b16 %v1616
        %v2130 = vunpack.c.l.b16 %v1617
        %v2131 = vunpack.c.l.b16 %v1618
        %v2132 = vunpack.c.l.b16 %v1619
        %v2133 = vunpack.c.l.b16 %v1620
        %v2134 = vunpack.c.l.b16 %v1621
        %v2135 = vpack.c.b16 %v2116, %v2115
        %v2136 = vpack.c.b16 %v2118, %v2117
        %v2137 = vpack.c.b16 %v2120, %v2119
        %v2138 = vpack.c.b16 %v2122, %v2121
        %v2139 = vpack.c.b16 %v2124, %v2123
        %v2140 = vpack.c.b16 %v2126, %v2125
        %v2141 = vpack.c.b16 %v2128, %v2127
        %v2142 = vpack.c.b16 %v2130, %v2129
        %v2143 = vpack.c.b16 %v2132, %v2131
        %v2144 = vpack.c.b16 %v2134, %v2133
        %v2155 = vld [vmem:[#allocation13] sm:$0xf]
        %v2156 = vld [vmem:[#allocation13 + $0x4] sm:$0xf]
        %v2157 = vld [vmem:[#allocation13 + $0x8] sm:$0xf]
        %v2158 = vld [vmem:[#allocation13 + $0xc] sm:$0xf]
        %v2159 = vld [vmem:[#allocation13 + $0x10] sm:$0xf]
        %v2160 = vld [vmem:[#allocation13 + $0x14] sm:$0xf]
        %v2161 = vld [vmem:[#allocation13 + $0x18] sm:$0xf]
        %v2162 = vld [vmem:[#allocation13 + $0x1c] sm:$0xf]
        %v2163 = vld [vmem:[#allocation13 + $0x20] sm:$0xf]
        %v2164 = vld [vmem:[#allocation13 + $0x24] sm:$0xf]
        %v2165 = vld [vmem:[#allocation13 + $0x28] sm:$0xf]
        %v2166 = vld [vmem:[#allocation13 + $0x2c] sm:$0xf]
        %v2167 = vld [vmem:[#allocation13 + $0x30] sm:$0xf]
        %v2168 = vld [vmem:[#allocation13 + $0x34] sm:$0xf]
        %v2169 = vld [vmem:[#allocation13 + $0x38] sm:$0xf]
        %v2170 = vld [vmem:[#allocation13 + $0x3c] sm:$0xf]
        %v2171 = vld [vmem:[#allocation13 + $0x40] sm:$0xf]
        %v2172 = vld [vmem:[#allocation13 + $0x44] sm:$0xf]
        %v2173 = vld [vmem:[#allocation13 + $0x48] sm:$0xf]
        %v2174 = vld [vmem:[#allocation13 + $0x4c] sm:$0xf]
        %v2175 = vld [vmem:[#allocation13 + $0x50] sm:$0xf]
        %v2176 = vld [vmem:[#allocation13 + $0x54] sm:$0xf]
        %v2177 = vld [vmem:[#allocation13 + $0x58] sm:$0xf]
        %v2178 = vld [vmem:[#allocation13 + $0x5c] sm:$0xf]
        %v2179 = vld [vmem:[#allocation13 + $0x60] sm:$0xf]
        %v2180 = vld [vmem:[#allocation13 + $0x64] sm:$0xf]
        %v2181 = vld [vmem:[#allocation13 + $0x68] sm:$0xf]
        %v2182 = vld [vmem:[#allocation13 + $0x6c] sm:$0xf]
        %v2183 = vld [vmem:[#allocation13 + $0x70] sm:$0xf]
        %v2184 = vld [vmem:[#allocation13 + $0x74] sm:$0xf]
        %v2185 = vld [vmem:[#allocation13 + $0x78] sm:$0xf]
        %v2186 = vld [vmem:[#allocation13 + $0x7c] sm:$0xf]
        %v2187 = vld [vmem:[#allocation13 + $0x80] sm:$0xf]
        %v2188 = vld [vmem:[#allocation13 + $0x84] sm:$0xf]
        %v2189 = vld [vmem:[#allocation13 + $0x88] sm:$0xf]
        %v2190 = vld [vmem:[#allocation13 + $0x8c] sm:$0xf]
        %v2191 = vld [vmem:[#allocation13 + $0x90] sm:$0xf]
        %v2192 = vld [vmem:[#allocation13 + $0x94] sm:$0xf]
        %v2193 = vld [vmem:[#allocation13 + $0x98] sm:$0xf]
        %v2194 = vld [vmem:[#allocation13 + $0x9c] sm:$0xf]
        %v2195 = vld [vmem:[#allocation13 + $0xa0] sm:$0xf]
        %v2196 = vld [vmem:[#allocation13 + $0xa4] sm:$0xf]
        %v2197 = vld [vmem:[#allocation13 + $0xa8] sm:$0xf]
        %v2198 = vld [vmem:[#allocation13 + $0xac] sm:$0xf]
        %v2199 = vld [vmem:[#allocation13 + $0xb0] sm:$0xf]
        %v2200 = vld [vmem:[#allocation13 + $0xb4] sm:$0xf]
        %v2201 = vld [vmem:[#allocation13 + $0xb8] sm:$0xf]
        %v2202 = vld [vmem:[#allocation13 + $0xbc] sm:$0xf]
        %v2203 = vld [vmem:[%s11 + $0x7] sm:$0x1]
        %v2205 = vperm.slane %v2203, 0
        %v2255 = vunpack.c.l.b16 %v2155
        %v2256 = vunpack.c.l.b16 %v2156
        %v2257 = vunpack.c.l.b16 %v2157
        %v2258 = vunpack.c.l.b16 %v2158
        %v2259 = vunpack.c.l.b16 %v2159
        %v2260 = vunpack.c.l.b16 %v2160
        %v2261 = vunpack.c.l.b16 %v2161
        %v2262 = vunpack.c.l.b16 %v2162
        %v2263 = vunpack.c.l.b16 %v2163
        %v2264 = vunpack.c.l.b16 %v2164
        %v2265 = vunpack.c.l.b16 %v2165
        %v2266 = vunpack.c.l.b16 %v2166
        %v2267 = vunpack.c.l.b16 %v2167
        %v2268 = vunpack.c.l.b16 %v2168
        %v2269 = vunpack.c.l.b16 %v2169
        %v2270 = vunpack.c.l.b16 %v2170
        %v2271 = vunpack.c.l.b16 %v2171
        %v2272 = vunpack.c.l.b16 %v2172
        %v2273 = vunpack.c.l.b16 %v2173
        %v2274 = vunpack.c.l.b16 %v2174
        %v2275 = vunpack.c.l.b16 %v2175
        %v2276 = vunpack.c.l.b16 %v2176
        %v2277 = vunpack.c.l.b16 %v2177
        %v2278 = vunpack.c.l.b16 %v2178
        %v2279 = vunpack.c.l.b16 %v2179
        %v2280 = vunpack.c.l.b16 %v2180
        %v2281 = vunpack.c.l.b16 %v2181
        %v2282 = vunpack.c.l.b16 %v2182
        %v2283 = vunpack.c.l.b16 %v2183
        %v2284 = vunpack.c.l.b16 %v2184
        %v2285 = vunpack.c.l.b16 %v2185
        %v2286 = vunpack.c.l.b16 %v2186
        %v2287 = vunpack.c.l.b16 %v2187
        %v2288 = vunpack.c.l.b16 %v2188
        %v2289 = vunpack.c.l.b16 %v2189
        %v2290 = vunpack.c.l.b16 %v2190
        %v2291 = vunpack.c.l.b16 %v2191
        %v2292 = vunpack.c.l.b16 %v2192
        %v2293 = vunpack.c.l.b16 %v2193
        %v2294 = vunpack.c.l.b16 %v2194
        %v2295 = vunpack.c.l.b16 %v2195
        %v2296 = vunpack.c.l.b16 %v2196
        %v2297 = vunpack.c.l.b16 %v2197
        %v2298 = vunpack.c.l.b16 %v2198
        %v2299 = vunpack.c.l.b16 %v2199
        %v2300 = vunpack.c.l.b16 %v2200
        %v2301 = vunpack.c.l.b16 %v2201
        %v2302 = vunpack.c.l.b16 %v2202
        %v2303 = vpack.c.b16 %v2256, %v2255
        %v2304 = vpack.c.b16 %v2258, %v2257
        %v2305 = vpack.c.b16 %v2260, %v2259
        %v2306 = vpack.c.b16 %v2262, %v2261
        %v2307 = vpack.c.b16 %v2264, %v2263
        %v2308 = vpack.c.b16 %v2266, %v2265
        %v2309 = vpack.c.b16 %v2268, %v2267
        %v2310 = vpack.c.b16 %v2270, %v2269
        %v2311 = vpack.c.b16 %v2272, %v2271
        %v2312 = vpack.c.b16 %v2274, %v2273
        %v2313 = vpack.c.b16 %v2276, %v2275
        %v2314 = vpack.c.b16 %v2278, %v2277
        %v2315 = vpack.c.b16 %v2280, %v2279
        %v2316 = vpack.c.b16 %v2282, %v2281
        %v2317 = vpack.c.b16 %v2284, %v2283
        %v2318 = vpack.c.b16 %v2286, %v2285
        %v2319 = vpack.c.b16 %v2288, %v2287
        %v2320 = vpack.c.b16 %v2290, %v2289
        %v2321 = vpack.c.b16 %v2292, %v2291
        %v2322 = vpack.c.b16 %v2294, %v2293
        %v2323 = vpack.c.b16 %v2296, %v2295
        %v2324 = vpack.c.b16 %v2298, %v2297
        %v2325 = vpack.c.b16 %v2300, %v2299
        %v2326 = vpack.c.b16 %v2302, %v2301
        %2351 = vmatpush.bf16.msra.mxu0 %v2310
        %2352 = vmatpush.bf16.msra.mxu0 %v2309
        %2353 = vmatpush.bf16.msra.mxu0 %v2308
        %2354 = vmatpush.bf16.msra.mxu0 %v2307
        %2355 = vmatpush.bf16.msra.mxu0 %v2306
        %2356 = vmatpush.bf16.msra.mxu0 %v2305
        %2357 = vmatpush.bf16.msra.mxu0 %v2304
        %2358 = vmatpush.bf16.msra.mxu0 %v2303
        %2359 = vmatmul.bf16.gmra.mxu0 %v2015
        %v2360 = vpop.f32.mrf.mxu0
        %v2361 = vadd.f32 %v2205, %v2360
        %v2362 = vpop.f32.mrf.mxu0
        %v2363 = vadd.f32 %v2205, %v2362
        %2364 = vmatmul.bf16.gmra.mxu0 %v2016
        %v2365 = vpop.f32.mrf.mxu0
        %v2366 = vadd.f32 %v2205, %v2365
        %v2367 = vpop.f32.mrf.mxu0
        %v2368 = vadd.f32 %v2205, %v2367
        %2369 = vmatmul.bf16.gmra.mxu0 %v2017
        %v2370 = vpop.f32.mrf.mxu0
        %v2371 = vadd.f32 %v2205, %v2370
        %v2372 = vpop.f32.mrf.mxu0
        %v2373 = vadd.f32 %v2205, %v2372
        %2374 = vmatmul.bf16.gmra.mxu0 %v2018
        %v2375 = vpop.f32.mrf.mxu0
        %v2376 = vadd.f32 %v2205, %v2375
        %v2377 = vpop.f32.mrf.mxu0
        %v2378 = vadd.f32 %v2205, %v2377
        %2379 = vmatmul.bf16.gmra.mxu0 %v2019
        %v2380 = vpop.f32.mrf.mxu0
        %v2381 = vadd.f32 %v2205, %v2380
        %v2382 = vpop.f32.mrf.mxu0
        %v2383 = vadd.f32 %v2205, %v2382
        %2384 = vmatmul.bf16.gmra.mxu0 %v2020
        %v2385 = vpop.f32.mrf.mxu0
        %v2386 = vadd.f32 %v2205, %v2385
        %v2387 = vpop.f32.mrf.mxu0
        %v2388 = vadd.f32 %v2205, %v2387
        %2389 = vmatmul.bf16.gmra.mxu0 %v2021
        %v2390 = vpop.f32.mrf.mxu0
        %v2391 = vadd.f32 %v2205, %v2390
        %v2392 = vpop.f32.mrf.mxu0
        %v2393 = vadd.f32 %v2205, %v2392
        %2394 = vmatmul.bf16.gmra.mxu0 %v2022
        %v2395 = vpop.f32.mrf.mxu0
        %v2396 = vadd.f32 %v2205, %v2395
        %v2397 = vpop.f32.mrf.mxu0
        %v2398 = vadd.f32 %v2205, %v2397
        %2399 = vmatmul.bf16.gmra.mxu0 %v2023
        %v2400 = vpop.f32.mrf.mxu0
        %v2401 = vadd.f32 %v2205, %v2400
        %v2402 = vpop.f32.mrf.mxu0
        %v2403 = vadd.f32 %v2205, %v2402
        %2404 = vmatmul.bf16.gmra.mxu0 %v2024
        %v2405 = vpop.f32.mrf.mxu0
        %v2406 = vadd.f32 %v2205, %v2405
        %v2407 = vpop.f32.mrf.mxu0
        %v2408 = vadd.f32 %v2205, %v2407
        %2409 = vdwg.mxu0
        %2410 = vmatpush.bf16.msra.mxu0 %v2318
        %2411 = vmatpush.bf16.msra.mxu0 %v2317
        %2412 = vmatpush.bf16.msra.mxu0 %v2316
        %2413 = vmatpush.bf16.msra.mxu0 %v2315
        %2414 = vmatpush.bf16.msra.mxu0 %v2314
        %2415 = vmatpush.bf16.msra.mxu0 %v2313
        %2416 = vmatpush.bf16.msra.mxu0 %v2312
        %2417 = vmatpush.bf16.msra.mxu0 %v2311
        %2418 = vmatmul.bf16.gmra.mxu0 %v2075
        %v2419 = vpop.f32.mrf.mxu0
        %v2420 = vadd.f32 %v2361, %v2419
        %v2421 = vpop.f32.mrf.mxu0
        %v2422 = vadd.f32 %v2363, %v2421
        %2423 = vmatmul.bf16.gmra.mxu0 %v2076
        %v2424 = vpop.f32.mrf.mxu0
        %v2425 = vadd.f32 %v2366, %v2424
        %v2426 = vpop.f32.mrf.mxu0
        %v2427 = vadd.f32 %v2368, %v2426
        %2428 = vmatmul.bf16.gmra.mxu0 %v2077
        %v2429 = vpop.f32.mrf.mxu0
        %v2430 = vadd.f32 %v2371, %v2429
        %v2431 = vpop.f32.mrf.mxu0
        %v2432 = vadd.f32 %v2373, %v2431
        %2433 = vmatmul.bf16.gmra.mxu0 %v2078
        %v2434 = vpop.f32.mrf.mxu0
        %v2435 = vadd.f32 %v2376, %v2434
        %v2436 = vpop.f32.mrf.mxu0
        %v2437 = vadd.f32 %v2378, %v2436
        %2438 = vmatmul.bf16.gmra.mxu0 %v2079
        %v2439 = vpop.f32.mrf.mxu0
        %v2440 = vadd.f32 %v2381, %v2439
        %v2441 = vpop.f32.mrf.mxu0
        %v2442 = vadd.f32 %v2383, %v2441
        %2443 = vmatmul.bf16.gmra.mxu0 %v2080
        %v2444 = vpop.f32.mrf.mxu0
        %v2445 = vadd.f32 %v2386, %v2444
        %v2446 = vpop.f32.mrf.mxu0
        %v2447 = vadd.f32 %v2388, %v2446
        %2448 = vmatmul.bf16.gmra.mxu0 %v2081
        %v2449 = vpop.f32.mrf.mxu0
        %v2450 = vadd.f32 %v2391, %v2449
        %v2451 = vpop.f32.mrf.mxu0
        %v2452 = vadd.f32 %v2393, %v2451
        %2453 = vmatmul.bf16.gmra.mxu0 %v2082
        %v2454 = vpop.f32.mrf.mxu0
        %v2455 = vadd.f32 %v2396, %v2454
        %v2456 = vpop.f32.mrf.mxu0
        %v2457 = vadd.f32 %v2398, %v2456
        %2458 = vmatmul.bf16.gmra.mxu0 %v2083
        %v2459 = vpop.f32.mrf.mxu0
        %v2460 = vadd.f32 %v2401, %v2459
        %v2461 = vpop.f32.mrf.mxu0
        %v2462 = vadd.f32 %v2403, %v2461
        %2463 = vmatmul.bf16.gmra.mxu0 %v2084
        %v2464 = vpop.f32.mrf.mxu0
        %v2465 = vadd.f32 %v2406, %v2464
        %v2466 = vpop.f32.mrf.mxu0
        %v2467 = vadd.f32 %v2408, %v2466
        %2468 = vdwg.mxu0
        %2469 = vmatpush.bf16.msra.mxu0 %v2326
        %2470 = vmatpush.bf16.msra.mxu0 %v2325
        %2471 = vmatpush.bf16.msra.mxu0 %v2324
        %2472 = vmatpush.bf16.msra.mxu0 %v2323
        %2473 = vmatpush.bf16.msra.mxu0 %v2322
        %2474 = vmatpush.bf16.msra.mxu0 %v2321
        %2475 = vmatpush.bf16.msra.mxu0 %v2320
        %2476 = vmatpush.bf16.msra.mxu0 %v2319
        %2477 = vmatmul.bf16.gmra.mxu0 %v2135
        %v2478 = vpop.f32.mrf.mxu0
        %v2479 = vadd.f32 %v2420, %v2478
        %v2480 = vpop.f32.mrf.mxu0
        %v2481 = vadd.f32 %v2422, %v2480
        %2482 = vmatmul.bf16.gmra.mxu0 %v2136
        %v2483 = vpop.f32.mrf.mxu0
        %v2484 = vadd.f32 %v2425, %v2483
        %v2485 = vpop.f32.mrf.mxu0
        %v2486 = vadd.f32 %v2427, %v2485
        %2487 = vmatmul.bf16.gmra.mxu0 %v2137
        %v2488 = vpop.f32.mrf.mxu0
        %v2489 = vadd.f32 %v2430, %v2488
        %v2490 = vpop.f32.mrf.mxu0
        %v2491 = vadd.f32 %v2432, %v2490
        %2492 = vmatmul.bf16.gmra.mxu0 %v2138
        %v2493 = vpop.f32.mrf.mxu0
        %v2494 = vadd.f32 %v2435, %v2493
        %v2495 = vpop.f32.mrf.mxu0
        %v2496 = vadd.f32 %v2437, %v2495
        %2497 = vmatmul.bf16.gmra.mxu0 %v2139
        %v2498 = vpop.f32.mrf.mxu0
        %v2499 = vadd.f32 %v2440, %v2498
        %v2500 = vpop.f32.mrf.mxu0
        %v2501 = vadd.f32 %v2442, %v2500
        %2502 = vmatmul.bf16.gmra.mxu0 %v2140
        %v2503 = vpop.f32.mrf.mxu0
        %v2504 = vadd.f32 %v2445, %v2503
        %v2505 = vpop.f32.mrf.mxu0
        %v2506 = vadd.f32 %v2447, %v2505
        %2507 = vmatmul.bf16.gmra.mxu0 %v2141
        %v2508 = vpop.f32.mrf.mxu0
        %v2509 = vadd.f32 %v2450, %v2508
        %v2510 = vpop.f32.mrf.mxu0
        %v2511 = vadd.f32 %v2452, %v2510
        %2512 = vmatmul.bf16.gmra.mxu0 %v2142
        %v2513 = vpop.f32.mrf.mxu0
        %v2514 = vadd.f32 %v2455, %v2513
        %v2515 = vpop.f32.mrf.mxu0
        %v2516 = vadd.f32 %v2457, %v2515
        %2517 = vmatmul.bf16.gmra.mxu0 %v2143
        %v2518 = vpop.f32.mrf.mxu0
        %v2519 = vadd.f32 %v2460, %v2518
        %v2520 = vpop.f32.mrf.mxu0
        %v2521 = vadd.f32 %v2462, %v2520
        %2522 = vmatmul.bf16.gmra.mxu0 %v2144
        %v2523 = vpop.f32.mrf.mxu0
        %v2524 = vadd.f32 %v2465, %v2523
        %v2525 = vpop.f32.mrf.mxu0
        %v2526 = vadd.f32 %v2467, %v2525
        %2527 = vdwg.mxu0
        %v2528 = vmul.f32 %v2479, 0.2
        %v2529 = vmul.f32 %v2481, 0.2
        %v2530 = vmul.f32 %v2484, 0.2
        %v2531 = vmul.f32 %v2486, 0.2
        %v2532 = vmul.f32 %v2489, 0.2
        %v2533 = vmul.f32 %v2491, 0.2
        %v2534 = vmul.f32 %v2494, 0.2
        %v2535 = vmul.f32 %v2496, 0.2
        %v2536 = vmul.f32 %v2499, 0.2
        %v2537 = vmul.f32 %v2501, 0.2
        %v2538 = vmul.f32 %v2504, 0.2
        %v2539 = vmul.f32 %v2506, 0.2
        %v2540 = vmul.f32 %v2509, 0.2
        %v2541 = vmul.f32 %v2511, 0.2
        %v2542 = vmul.f32 %v2514, 0.2
        %v2543 = vmul.f32 %v2516, 0.2
        %v2544 = vmul.f32 %v2519, 0.2
        %v2545 = vmul.f32 %v2521, 0.2
        %v2546 = vmul.f32 %v2524, 0.2
        %v2547 = vmul.f32 %v2526, 0.2
        %v2548 = vmax.f32 %v2479, %v2528
        %v2549 = vmax.f32 %v2481, %v2529
        %v2550 = vmax.f32 %v2484, %v2530
        %v2551 = vmax.f32 %v2486, %v2531
        %v2552 = vmax.f32 %v2489, %v2532
        %v2553 = vmax.f32 %v2491, %v2533
        %v2554 = vmax.f32 %v2494, %v2534
        %v2555 = vmax.f32 %v2496, %v2535
        %v2556 = vmax.f32 %v2499, %v2536
        %v2557 = vmax.f32 %v2501, %v2537
        %v2558 = vmax.f32 %v2504, %v2538
        %v2559 = vmax.f32 %v2506, %v2539
        %v2560 = vmax.f32 %v2509, %v2540
        %v2561 = vmax.f32 %v2511, %v2541
        %v2562 = vmax.f32 %v2514, %v2542
        %v2563 = vmax.f32 %v2516, %v2543
        %v2564 = vmax.f32 %v2519, %v2544
        %v2565 = vmax.f32 %v2521, %v2545
        %v2566 = vmax.f32 %v2524, %v2546
        %v2567 = vmax.f32 %v2526, %v2547
        %v2568 = vpack.c.bf16 %v2549, %v2548
        %v2569 = vpack.c.bf16 %v2551, %v2550
        %v2570 = vpack.c.bf16 %v2553, %v2552
        %v2571 = vpack.c.bf16 %v2555, %v2554
        %v2572 = vpack.c.bf16 %v2557, %v2556
        %v2573 = vpack.c.bf16 %v2559, %v2558
        %v2574 = vpack.c.bf16 %v2561, %v2560
        %v2575 = vpack.c.bf16 %v2563, %v2562
        %v2576 = vpack.c.bf16 %v2565, %v2564
        %v2577 = vpack.c.bf16 %v2567, %v2566
        %v2578 = vld [vmem:[#allocation14] sm:$0xf]
        %v2579 = vld [vmem:[#allocation14 + $0x4] sm:$0xf]
        %v2580 = vld [vmem:[#allocation14 + $0x8] sm:$0xf]
        %v2581 = vld [vmem:[#allocation14 + $0xc] sm:$0xf]
        %v2582 = vld [vmem:[#allocation14 + $0x10] sm:$0xf]
        %v2583 = vld [vmem:[#allocation14 + $0x14] sm:$0xf]
        %v2584 = vld [vmem:[#allocation14 + $0x18] sm:$0xf]
        %v2585 = vld [vmem:[#allocation14 + $0x1c] sm:$0xf]
        %v2586 = vld [vmem:[#allocation14 + $0x20] sm:$0xf]
        %v2587 = vld [vmem:[#allocation14 + $0x24] sm:$0xf]
        %v2588 = vld [vmem:[#allocation14 + $0x28] sm:$0xf]
        %v2589 = vld [vmem:[#allocation14 + $0x2c] sm:$0xf]
        %v2590 = vld [vmem:[#allocation14 + $0x30] sm:$0xf]
        %v2591 = vld [vmem:[#allocation14 + $0x34] sm:$0xf]
        %v2592 = vld [vmem:[#allocation14 + $0x38] sm:$0xf]
        %v2593 = vld [vmem:[#allocation14 + $0x3c] sm:$0xf]
        %v2594 = vld [vmem:[%s11 + $0x8] sm:$0x1]
        %v2596 = vperm.slane %v2594, 0
        %v2614 = vunpack.c.l.b16 %v2578
        %v2615 = vunpack.c.l.b16 %v2579
        %v2616 = vunpack.c.l.b16 %v2580
        %v2617 = vunpack.c.l.b16 %v2581
        %v2618 = vunpack.c.l.b16 %v2582
        %v2619 = vunpack.c.l.b16 %v2583
        %v2620 = vunpack.c.l.b16 %v2584
        %v2621 = vunpack.c.l.b16 %v2585
        %v2622 = vunpack.c.l.b16 %v2586
        %v2623 = vunpack.c.l.b16 %v2587
        %v2624 = vunpack.c.l.b16 %v2588
        %v2625 = vunpack.c.l.b16 %v2589
        %v2626 = vunpack.c.l.b16 %v2590
        %v2627 = vunpack.c.l.b16 %v2591
        %v2628 = vunpack.c.l.b16 %v2592
        %v2629 = vunpack.c.l.b16 %v2593
        %v2630 = vpack.c.b16 %v2615, %v2614
        %v2631 = vpack.c.b16 %v2617, %v2616
        %v2632 = vpack.c.b16 %v2619, %v2618
        %v2633 = vpack.c.b16 %v2621, %v2620
        %v2634 = vpack.c.b16 %v2623, %v2622
        %v2635 = vpack.c.b16 %v2625, %v2624
        %v2636 = vpack.c.b16 %v2627, %v2626
        %v2637 = vpack.c.b16 %v2629, %v2628
        %2646 = vmatpush.bf16.msra.mxu0 %v2637
        %2647 = vmatpush.bf16.msra.mxu0 %v2636
        %2648 = vmatpush.bf16.msra.mxu0 %v2635
        %2649 = vmatpush.bf16.msra.mxu0 %v2634
        %2650 = vmatpush.bf16.msra.mxu0 %v2633
        %2651 = vmatpush.bf16.msra.mxu0 %v2632
        %2652 = vmatpush.bf16.msra.mxu0 %v2631
        %2653 = vmatpush.bf16.msra.mxu0 %v2630
        %2654 = vmatmul.bf16.gmra.mxu0 %v2568
        %v2655 = vpop.f32.mrf.mxu0
        %v2656 = vadd.f32 %v2596, %v2655
        %v2657 = vpop.f32.mrf.mxu0
        %v2658 = vadd.f32 %v2596, %v2657
        %2659 = vmatmul.bf16.gmra.mxu0 %v2569
        %v2660 = vpop.f32.mrf.mxu0
        %v2661 = vadd.f32 %v2596, %v2660
        %v2662 = vpop.f32.mrf.mxu0
        %v2663 = vadd.f32 %v2596, %v2662
        %2664 = vmatmul.bf16.gmra.mxu0 %v2570
        %v2665 = vpop.f32.mrf.mxu0
        %v2666 = vadd.f32 %v2596, %v2665
        %v2667 = vpop.f32.mrf.mxu0
        %v2668 = vadd.f32 %v2596, %v2667
        %2669 = vmatmul.bf16.gmra.mxu0 %v2571
        %v2670 = vpop.f32.mrf.mxu0
        %v2671 = vadd.f32 %v2596, %v2670
        %v2672 = vpop.f32.mrf.mxu0
        %v2673 = vadd.f32 %v2596, %v2672
        %2674 = vmatmul.bf16.gmra.mxu0 %v2572
        %v2675 = vpop.f32.mrf.mxu0
        %v2676 = vadd.f32 %v2596, %v2675
        %v2677 = vpop.f32.mrf.mxu0
        %v2678 = vadd.f32 %v2596, %v2677
        %2679 = vmatmul.bf16.gmra.mxu0 %v2573
        %v2680 = vpop.f32.mrf.mxu0
        %v2681 = vadd.f32 %v2596, %v2680
        %v2682 = vpop.f32.mrf.mxu0
        %v2683 = vadd.f32 %v2596, %v2682
        %2684 = vmatmul.bf16.gmra.mxu0 %v2574
        %v2685 = vpop.f32.mrf.mxu0
        %v2686 = vadd.f32 %v2596, %v2685
        %v2687 = vpop.f32.mrf.mxu0
        %v2688 = vadd.f32 %v2596, %v2687
        %2689 = vmatmul.bf16.gmra.mxu0 %v2575
        %v2690 = vpop.f32.mrf.mxu0
        %v2691 = vadd.f32 %v2596, %v2690
        %v2692 = vpop.f32.mrf.mxu0
        %v2693 = vadd.f32 %v2596, %v2692
        %2694 = vmatmul.bf16.gmra.mxu0 %v2576
        %v2695 = vpop.f32.mrf.mxu0
        %v2696 = vadd.f32 %v2596, %v2695
        %v2697 = vpop.f32.mrf.mxu0
        %v2698 = vadd.f32 %v2596, %v2697
        %2699 = vmatmul.bf16.gmra.mxu0 %v2577
        %v2700 = vpop.f32.mrf.mxu0
        %v2701 = vadd.f32 %v2596, %v2700
        %v2702 = vpop.f32.mrf.mxu0
        %v2703 = vadd.f32 %v2596, %v2702
        %2704 = vdwg.mxu0
        %v2705 = vmul.f32 %v2656, 0.2
        %v2706 = vmul.f32 %v2658, 0.2
        %v2707 = vmul.f32 %v2661, 0.2
        %v2708 = vmul.f32 %v2663, 0.2
        %v2709 = vmul.f32 %v2666, 0.2
        %v2710 = vmul.f32 %v2668, 0.2
        %v2711 = vmul.f32 %v2671, 0.2
        %v2712 = vmul.f32 %v2673, 0.2
        %v2713 = vmul.f32 %v2676, 0.2
        %v2714 = vmul.f32 %v2678, 0.2
        %v2715 = vmul.f32 %v2681, 0.2
        %v2716 = vmul.f32 %v2683, 0.2
        %v2717 = vmul.f32 %v2686, 0.2
        %v2718 = vmul.f32 %v2688, 0.2
        %v2719 = vmul.f32 %v2691, 0.2
        %v2720 = vmul.f32 %v2693, 0.2
        %v2721 = vmul.f32 %v2696, 0.2
        %v2722 = vmul.f32 %v2698, 0.2
        %v2723 = vmul.f32 %v2701, 0.2
        %v2724 = vmul.f32 %v2703, 0.2
        %v2725 = vmax.f32 %v2656, %v2705
        %v2726 = vmax.f32 %v2658, %v2706
        %v2727 = vmax.f32 %v2661, %v2707
        %v2728 = vmax.f32 %v2663, %v2708
        %v2729 = vmax.f32 %v2666, %v2709
        %v2730 = vmax.f32 %v2668, %v2710
        %v2731 = vmax.f32 %v2671, %v2711
        %v2732 = vmax.f32 %v2673, %v2712
        %v2733 = vmax.f32 %v2676, %v2713
        %v2734 = vmax.f32 %v2678, %v2714
        %v2735 = vmax.f32 %v2681, %v2715
        %v2736 = vmax.f32 %v2683, %v2716
        %v2737 = vmax.f32 %v2686, %v2717
        %v2738 = vmax.f32 %v2688, %v2718
        %v2739 = vmax.f32 %v2691, %v2719
        %v2740 = vmax.f32 %v2693, %v2720
        %v2741 = vmax.f32 %v2696, %v2721
        %v2742 = vmax.f32 %v2698, %v2722
        %v2743 = vmax.f32 %v2701, %v2723
        %v2744 = vmax.f32 %v2703, %v2724
        %2745 = vst [vmem:[%s556] sm:$0xff] %v2725
        %2746 = vst [vmem:[%s556 + $0x8] sm:$0xff] %v2726
        %2747 = vst [vmem:[%s556 + $0x10] sm:$0xff] %v2727
        %2748 = vst [vmem:[%s556 + $0x18] sm:$0xff] %v2728
        %2749 = vst [vmem:[%s556 + $0x20] sm:$0xff] %v2729
        %2750 = vst [vmem:[%s556 + $0x28] sm:$0xff] %v2730
        %2751 = vst [vmem:[%s556 + $0x30] sm:$0xff] %v2731
        %2752 = vst [vmem:[%s556 + $0x38] sm:$0xff] %v2732
        %2753 = vst [vmem:[%s556 + $0x40] sm:$0xff] %v2733
        %2754 = vst [vmem:[%s556 + $0x48] sm:$0xff] %v2734
        %2755 = vst [vmem:[%s556 + $0x50] sm:$0xff] %v2735
        %2756 = vst [vmem:[%s556 + $0x58] sm:$0xff] %v2736
        %2757 = vst [vmem:[%s556 + $0x60] sm:$0xff] %v2737
        %2758 = vst [vmem:[%s556 + $0x68] sm:$0xff] %v2738
        %2759 = vst [vmem:[%s556 + $0x70] sm:$0xff] %v2739
        %2760 = vst [vmem:[%s556 + $0x78] sm:$0xff] %v2740
        %2761 = vst [vmem:[%s556 + $0x80] sm:$0xff] %v2741
        %2762 = vst [vmem:[%s556 + $0x88] sm:$0xff] %v2742
        %2763 = vst [vmem:[%s556 + $0x90] sm:$0xff] %v2743
        %2764 = vst [vmem:[%s556 + $0x98] sm:$0xff] %v2744
        %s2765 = sand.u32 %s301, 1
        %s2766 = scalar_lea.sflag [#allocation4], %s2765
        %s2767 = sand.u32 %s301, 1
        %s2768 = smul.addr %s2767, 160
        %s2769 = scalar_lea.vmem [#allocation16], %s2768
        // Predicated region
        $region101: #{tpu_custom_call.1} parent=67 // pred_check
          %p2770 = pneg %p311
        $region102: #{tpu_custom_call.1} parent=67 // pred_check_branch
          %2772 = sbr.rel (%p2770) target = $region104
        $region103: #{tpu_custom_call.1} parent=67 // pred_region
          %s2773 = smul.u32 20, %s31
          %2775 = vsyncadd %s2766, 0
          %s2776 = smul.addr %s2773, 8
          %s2777 = scalar_lea.hbm %s12, %s2776
          %s2778 = sshll.u32 %s2769, 4
          %s2779 = int_to_ptr.vmem [resolvable:$true] %s2778
          %s2780 = sshll.u32 %s2777, 4
          %s2781 = int_to_ptr.hbm [resolvable:$true] %s2780
          %2786 = dma.vmem_to_hbm [thread:$0]  %s2779, 2560, %s2781, %s2766, 128, 128, 8
        $region104: #{tpu_custom_call.1} parent=67 // pred_fallthru
          _
      $region68: #{tpu_custom_call.1} parent=5 // pred_fallthru
        _
      %p2787 = scmp.le.s32.totalorder 2, %s26
      // Predicated region
      $region105: #{tpu_custom_call.1} parent=5 // pred_check
        %p2788 = pneg %p2787
      $region106: #{tpu_custom_call.1} parent=5 // pred_check_branch
        %2790 = sbr.rel (%p2788) target = $region108
      $region107: #{tpu_custom_call.1} parent=5 // pred_region
        %s2791 = ssub.s32 %s26, 2
        // Predicated region
        $region109: #{tpu_custom_call.1} parent=107 // pred_check
          %p2792 = pneg %p317
        $region110: #{tpu_custom_call.1} parent=107 // pred_check_branch
          %2794 = sbr.rel (%p2792) target = $region112
        $region111: #{tpu_custom_call.1} parent=107 // pred_region
          %s2795 = sand.u32 %s302, 1
          %s2796 = scalar_lea.sflag [#allocation4], %s2795
          %s2797 = sand.u32 %s302, 1
          %s2798 = smul.addr %s2797, 160
          %s2799 = scalar_lea.vmem [#allocation16], %s2798
          %2801 = dma.done %s2796, 2560
        $region112: #{tpu_custom_call.1} parent=107 // pred_fallthru
          _
      $region108: #{tpu_custom_call.1} parent=5 // pred_fallthru
        _
    $region6: #{tpu_custom_call.1} parent=1 // loop_footer
      %s30 = sadd.s32 1, %s26
    $region7: #{tpu_custom_call.1} parent=1 // loop_footer_branch
      %25 = sbr.rel target = $region3
    $region8: #{tpu_custom_call.1} parent=1 // loop_exit
      _
    %2802 = vsyncpa [#allocation3], 1
    %s2803 = scalar_lea.sflag [#allocation3], 1
    %2804 = vsyncpa %s2803, 1
    %2805 = vsyncpa [#allocation6], 1
    %2806 = vsyncpa [#allocation9], 1
    %2807 = vsyncpa [#allocation12], 1
    %2808 = vsyncpa [#allocation15], 1
    %2809 = vsyncpa [#allocation4], 1
    %s2810 = scalar_lea.sflag [#allocation4], 1
    %2811 = vsyncpa %s2810, 1

</llo_original>
